<compile_context>
chip_gen: v6e
topology: v6e:2x2x1
jax: 0.10.0
libtpu: 0.0.40
codegen_flags: <defaults>
</compile_context>

<pallas_src>
import jax
import jax.numpy as jnp
from jax import lax
from jax.experimental import pallas as pl
from jax.experimental.pallas import tpu as pltpu


@jax.jit
def conv2d_pallas(x_nchw, weight, bias):
    N, Cin, H, W = x_nchw.shape
    Cout, Cin_w, KH, KW = weight.shape
    assert Cin == Cin_w
    OH, OW = H - KH + 1, W - KW + 1           # stride=1, padding=0 ("VALID")
    HW = H * W
    HWp = pl.cdiv(HW, 128) * 128              # lane-pad each image (no-op for 16x16)
    Cout_p = pl.cdiv(Cout, 8) * 8             # sublane-pad output channels (6 -> 8)
    L = N * HWp                               # lane extent of the batched matmul

    # --- glue (tiny, fused into this jit): reshape, pad, repack weights/bias ---
    x3 = x_nchw.reshape(N, Cin, HW)
    if HWp != HW:
        x3 = jnp.pad(x3, ((0, 0), (0, 0), (0, HWp - HW)))
    w_p = jnp.pad(weight, ((0, Cout_p - Cout), (0, 0), (0, 0), (0, 0)))
    # (KH*KW, Cout_p, Cin): tap-major slices, tap index t = kh*KW + kw.
    w_taps = jnp.transpose(w_p, (2, 3, 0, 1)).reshape(KH * KW, Cout_p, Cin)
    b_p = jnp.pad(bias, (0, Cout_p - Cout)).reshape(Cout_p, 1)

    def kernel(x_ref, w_ref, b_ref, o_ref):
        # x_ref: (N, Cin, HWp)        raw images, lane-dense over H*W
        # w_ref: (KH*KW, Cout_p, Cin) per-tap filter slices
        # b_ref: (Cout_p, 1)          bias
        # o_ref: (N, Cout_p, HWp)     full-size output maps (cropped by the caller)
        imgs = [x_ref[i] for i in range(N)]
        # Collapse the batch into lanes; concat boundaries are 128-aligned.
        x = imgs[0] if N == 1 else jnp.concatenate(imgs, axis=-1)     # (Cin, L)
        acc = jnp.broadcast_to(b_ref[...], (Cout_p, L))               # bias, once
        t = 0
        for kh in range(KH):
            for kw in range(KW):
                d = kh * W + kw                       # flat tap offset within an image
                # Bring x[:, j + d] to lane j (jnp.roll semantics: shift = L - d).
                xt = x if d == 0 else pltpu.roll(x, shift=L - d, axis=1)
                acc = acc + jnp.dot(w_ref[t], xt,
                                    preferred_element_type=jnp.float32)
                t += 1
        for i in range(N):                            # 128-aligned lane slices
            o_ref[i] = acc[:, i * HWp:(i + 1) * HWp].astype(o_ref.dtype)

    out = pl.pallas_call(
        kernel,
        out_shape=jax.ShapeDtypeStruct((N, Cout_p, HWp), x_nchw.dtype),
        grid_spec=pltpu.PrefetchScalarGridSpec(
            num_scalar_prefetch=0,
            grid=(1,),                                # whole problem in one VMEM block
            in_specs=[
                pl.BlockSpec((N, Cin, HWp), lambda i: (0, 0, 0)),            # images
                pl.BlockSpec((KH * KW, Cout_p, Cin), lambda i: (0, 0, 0)),   # filters
                pl.BlockSpec((Cout_p, 1), lambda i: (0, 0)),                 # bias
            ],
            out_specs=pl.BlockSpec((N, Cout_p, HWp), lambda i: (0, 0, 0)),
        ),
        compiler_params=pltpu.CompilerParams(
            dimension_semantics=("arbitrary",)),
    )(x3, w_taps, b_p)

    # Crop padded channels / lanes and restore NCHW; no transposes needed.
    return out[:, :Cout, :HW].reshape(N, Cout, H, W)[:, :, :OH, :OW]


def init_params(key, cin=3, cout=6, k=3):
    # Deterministic init mimicking nn.Conv2d default: U(-b, b), b = 1/sqrt(fan_in).
    fan_in = cin * k * k
    bound = 1.0 / (fan_in ** 0.5)
    kw_key, kb_key = jax.random.split(key)
    weight = jax.random.uniform(kw_key, (cout, cin, k, k), jnp.float32, -bound, bound)
    bias = jax.random.uniform(kb_key, (cout,), jnp.float32, -bound, bound)
    return weight, bias


if __name__ == "__main__":
    key = jax.random.PRNGKey(0)
    kx, kp = jax.random.split(key)
    x = jax.random.normal(kx, (2, 3, 16, 16), jnp.float32)      # NCHW like PyTorch
    weight, bias = init_params(kp)

    out = conv2d_pallas(x, weight, bias)
    out = jax.block_until_ready(out)

    # Reference check against XLA's conv (same NCHW / OIHW convention as PyTorch).
    ref = lax.conv_general_dilated(
        x, weight, window_strides=(1, 1), padding="VALID",
        dimension_numbers=("NCHW", "OIHW", "NCHW")) + bias[None, :, None, None]

    assert out.shape == (2, 6, 14, 14), out.shape
    assert jnp.allclose(out, ref, atol=1e-5, rtol=1e-5)
    print("KERNEL_OK")
</pallas_src>

<mosaic_0001>
module attributes {stable_mosaic.version = 11 : i64} {
  func.func @kernel(%arg0: i32, %arg1: memref<2x3x256xf32, #tpu.memory_space<vmem>>, %arg2: memref<9x8x3xf32, #tpu.memory_space<vmem>>, %arg3: memref<8x1xf32, #tpu.memory_space<vmem>>, %arg4: memref<2x8x256xf32, #tpu.memory_space<vmem>>) attributes {dimension_semantics = [#tpu.dimension_semantics<arbitrary>], iteration_bounds = array<i64: 1>, scalar_prefetch = 0 : i64, scratch_operands = 0 : i64, tpu.core_type = #tpu.core_type<tc>, window_params = [{pipeline_mode = #tpu.pipeline_mode<synchronous>, transform_indices = @transform_0, window_bounds = array<i64: 2, 3, 256>}, {pipeline_mode = #tpu.pipeline_mode<synchronous>, transform_indices = @transform_1, window_bounds = array<i64: 9, 8, 3>}, {pipeline_mode = #tpu.pipeline_mode<synchronous>, transform_indices = @transform_2, window_bounds = array<i64: 8, 1>}, {pipeline_mode = #tpu.pipeline_mode<synchronous>, transform_indices = @transform_3, window_bounds = array<i64: 2, 8, 256>}]} {
    %c0 = arith.constant 0 : index
    %c0_0 = arith.constant 0 : index
    %c0_1 = arith.constant 0 : index
    %0 = vector.load %arg1[%c0, %c0_0, %c0_1] : memref<2x3x256xf32, #tpu.memory_space<vmem>>, vector<1x3x256xf32>
    %1 = vector.shape_cast %0 : vector<1x3x256xf32> to vector<3x256xf32>
    %c1 = arith.constant 1 : index
    %c0_2 = arith.constant 0 : index
    %c0_3 = arith.constant 0 : index
    %2 = vector.load %arg1[%c1, %c0_2, %c0_3] : memref<2x3x256xf32, #tpu.memory_space<vmem>>, vector<1x3x256xf32>
    %3 = vector.shape_cast %2 : vector<1x3x256xf32> to vector<3x256xf32>
    %4 = tpu.concatenate %1, %3 in 1 : vector<3x256xf32>, vector<3x256xf32> -> vector<3x512xf32>
    %c0_4 = arith.constant 0 : index
    %c0_5 = arith.constant 0 : index
    %5 = vector.load %arg3[%c0_4, %c0_5] : memref<8x1xf32, #tpu.memory_space<vmem>>, vector<8x1xf32>
    %6 = vector.shape_cast %5 : vector<8x1xf32> to vector<8x1xf32>
    %7 = vector.broadcast %6 : vector<8x1xf32> to vector<8x512xf32>
    %c0_6 = arith.constant 0 : index
    %c0_7 = arith.constant 0 : index
    %c0_8 = arith.constant 0 : index
    %8 = vector.load %arg2[%c0_6, %c0_7, %c0_8] : memref<9x8x3xf32, #tpu.memory_space<vmem>>, vector<1x8x3xf32>
    %9 = vector.shape_cast %8 : vector<1x8x3xf32> to vector<8x3xf32>
    %cst = arith.constant dense<0.000000e+00> : vector<8x512xf32>
    %10 = tpu.matmul %9, %4, %cst {dimension_numbers = #tpu.dot_dimension_numbers<[1], [0], [0], [1], [0, 0, 1, 1], [], []>} : vector<8x3xf32>, vector<3x512xf32>, vector<8x512xf32> -> vector<8x512xf32>
    %11 = arith.addf %7, %10 : vector<8x512xf32>
    %c511_i32 = arith.constant 511 : i32
    %12 = tpu.dynamic_rotate %4 by %c511_i32 dim 1 : vector<3x512xf32>, i32 -> vector<3x512xf32>
    %c1_9 = arith.constant 1 : index
    %c0_10 = arith.constant 0 : index
    %c0_11 = arith.constant 0 : index
    %13 = vector.load %arg2[%c1_9, %c0_10, %c0_11] : memref<9x8x3xf32, #tpu.memory_space<vmem>>, vector<1x8x3xf32>
    %14 = vector.shape_cast %13 : vector<1x8x3xf32> to vector<8x3xf32>
    %cst_12 = arith.constant dense<0.000000e+00> : vector<8x512xf32>
    %15 = tpu.matmul %14, %12, %cst_12 {dimension_numbers = #tpu.dot_dimension_numbers<[1], [0], [0], [1], [0, 0, 1, 1], [], []>} : vector<8x3xf32>, vector<3x512xf32>, vector<8x512xf32> -> vector<8x512xf32>
    %16 = arith.addf %11, %15 : vector<8x512xf32>
    %c510_i32 = arith.constant 510 : i32
    %17 = tpu.dynamic_rotate %4 by %c510_i32 dim 1 : vector<3x512xf32>, i32 -> vector<3x512xf32>
    %c2 = arith.constant 2 : index
    %c0_13 = arith.constant 0 : index
    %c0_14 = arith.constant 0 : index
    %18 = vector.load %arg2[%c2, %c0_13, %c0_14] : memref<9x8x3xf32, #tpu.memory_space<vmem>>, vector<1x8x3xf32>
    %19 = vector.shape_cast %18 : vector<1x8x3xf32> to vector<8x3xf32>
    %cst_15 = arith.constant dense<0.000000e+00> : vector<8x512xf32>
    %20 = tpu.matmul %19, %17, %cst_15 {dimension_numbers = #tpu.dot_dimension_numbers<[1], [0], [0], [1], [0, 0, 1, 1], [], []>} : vector<8x3xf32>, vector<3x512xf32>, vector<8x512xf32> -> vector<8x512xf32>
    %21 = arith.addf %16, %20 : vector<8x512xf32>
    %c496_i32 = arith.constant 496 : i32
    %22 = tpu.dynamic_rotate %4 by %c496_i32 dim 1 : vector<3x512xf32>, i32 -> vector<3x512xf32>
    %c3 = arith.constant 3 : index
    %c0_16 = arith.constant 0 : index
    %c0_17 = arith.constant 0 : index
    %23 = vector.load %arg2[%c3, %c0_16, %c0_17] : memref<9x8x3xf32, #tpu.memory_space<vmem>>, vector<1x8x3xf32>
    %24 = vector.shape_cast %23 : vector<1x8x3xf32> to vector<8x3xf32>
    %cst_18 = arith.constant dense<0.000000e+00> : vector<8x512xf32>
    %25 = tpu.matmul %24, %22, %cst_18 {dimension_numbers = #tpu.dot_dimension_numbers<[1], [0], [0], [1], [0, 0, 1, 1], [], []>} : vector<8x3xf32>, vector<3x512xf32>, vector<8x512xf32> -> vector<8x512xf32>
    %26 = arith.addf %21, %25 : vector<8x512xf32>
    %c495_i32 = arith.constant 495 : i32
    %27 = tpu.dynamic_rotate %4 by %c495_i32 dim 1 : vector<3x512xf32>, i32 -> vector<3x512xf32>
    %c4 = arith.constant 4 : index
    %c0_19 = arith.constant 0 : index
    %c0_20 = arith.constant 0 : index
    %28 = vector.load %arg2[%c4, %c0_19, %c0_20] : memref<9x8x3xf32, #tpu.memory_space<vmem>>, vector<1x8x3xf32>
    %29 = vector.shape_cast %28 : vector<1x8x3xf32> to vector<8x3xf32>
    %cst_21 = arith.constant dense<0.000000e+00> : vector<8x512xf32>
    %30 = tpu.matmul %29, %27, %cst_21 {dimension_numbers = #tpu.dot_dimension_numbers<[1], [0], [0], [1], [0, 0, 1, 1], [], []>} : vector<8x3xf32>, vector<3x512xf32>, vector<8x512xf32> -> vector<8x512xf32>
    %31 = arith.addf %26, %30 : vector<8x512xf32>
    %c494_i32 = arith.constant 494 : i32
    %32 = tpu.dynamic_rotate %4 by %c494_i32 dim 1 : vector<3x512xf32>, i32 -> vector<3x512xf32>
    %c5 = arith.constant 5 : index
    %c0_22 = arith.constant 0 : index
    %c0_23 = arith.constant 0 : index
    %33 = vector.load %arg2[%c5, %c0_22, %c0_23] : memref<9x8x3xf32, #tpu.memory_space<vmem>>, vector<1x8x3xf32>
    %34 = vector.shape_cast %33 : vector<1x8x3xf32> to vector<8x3xf32>
    %cst_24 = arith.constant dense<0.000000e+00> : vector<8x512xf32>
    %35 = tpu.matmul %34, %32, %cst_24 {dimension_numbers = #tpu.dot_dimension_numbers<[1], [0], [0], [1], [0, 0, 1, 1], [], []>} : vector<8x3xf32>, vector<3x512xf32>, vector<8x512xf32> -> vector<8x512xf32>
    %36 = arith.addf %31, %35 : vector<8x512xf32>
    %c480_i32 = arith.constant 480 : i32
    %37 = tpu.dynamic_rotate %4 by %c480_i32 dim 1 : vector<3x512xf32>, i32 -> vector<3x512xf32>
    %c6 = arith.constant 6 : index
    %c0_25 = arith.constant 0 : index
    %c0_26 = arith.constant 0 : index
    %38 = vector.load %arg2[%c6, %c0_25, %c0_26] : memref<9x8x3xf32, #tpu.memory_space<vmem>>, vector<1x8x3xf32>
    %39 = vector.shape_cast %38 : vector<1x8x3xf32> to vector<8x3xf32>
    %cst_27 = arith.constant dense<0.000000e+00> : vector<8x512xf32>
    %40 = tpu.matmul %39, %37, %cst_27 {dimension_numbers = #tpu.dot_dimension_numbers<[1], [0], [0], [1], [0, 0, 1, 1], [], []>} : vector<8x3xf32>, vector<3x512xf32>, vector<8x512xf32> -> vector<8x512xf32>
    %41 = arith.addf %36, %40 : vector<8x512xf32>
    %c479_i32 = arith.constant 479 : i32
    %42 = tpu.dynamic_rotate %4 by %c479_i32 dim 1 : vector<3x512xf32>, i32 -> vector<3x512xf32>
    %c7 = arith.constant 7 : index
    %c0_28 = arith.constant 0 : index
    %c0_29 = arith.constant 0 : index
    %43 = vector.load %arg2[%c7, %c0_28, %c0_29] : memref<9x8x3xf32, #tpu.memory_space<vmem>>, vector<1x8x3xf32>
    %44 = vector.shape_cast %43 : vector<1x8x3xf32> to vector<8x3xf32>
    %cst_30 = arith.constant dense<0.000000e+00> : vector<8x512xf32>
    %45 = tpu.matmul %44, %42, %cst_30 {dimension_numbers = #tpu.dot_dimension_numbers<[1], [0], [0], [1], [0, 0, 1, 1], [], []>} : vector<8x3xf32>, vector<3x512xf32>, vector<8x512xf32> -> vector<8x512xf32>
    %46 = arith.addf %41, %45 : vector<8x512xf32>
    %c478_i32 = arith.constant 478 : i32
    %47 = tpu.dynamic_rotate %4 by %c478_i32 dim 1 : vector<3x512xf32>, i32 -> vector<3x512xf32>
    %c8 = arith.constant 8 : index
    %c0_31 = arith.constant 0 : index
    %c0_32 = arith.constant 0 : index
    %48 = vector.load %arg2[%c8, %c0_31, %c0_32] : memref<9x8x3xf32, #tpu.memory_space<vmem>>, vector<1x8x3xf32>
    %49 = vector.shape_cast %48 : vector<1x8x3xf32> to vector<8x3xf32>
    %cst_33 = arith.constant dense<0.000000e+00> : vector<8x512xf32>
    %50 = tpu.matmul %49, %47, %cst_33 {dimension_numbers = #tpu.dot_dimension_numbers<[1], [0], [0], [1], [0, 0, 1, 1], [], []>} : vector<8x3xf32>, vector<3x512xf32>, vector<8x512xf32> -> vector<8x512xf32>
    %51 = arith.addf %46, %50 : vector<8x512xf32>
    %52 = vector.extract_strided_slice %51 {offsets = [0, 0], sizes = [8, 256], strides = [1, 1]} : vector<8x512xf32> to vector<8x256xf32>
    %c0_34 = arith.constant 0 : index
    %c0_35 = arith.constant 0 : index
    %c0_36 = arith.constant 0 : index
    %53 = vector.load %arg4[%c0_34, %c0_35, %c0_36] : memref<2x8x256xf32, #tpu.memory_space<vmem>>, vector<1x8x256xf32>
    %54 = vector.shape_cast %53 : vector<1x8x256xf32> to vector<8x256xf32>
    %55 = vector.shape_cast %52 : vector<8x256xf32> to vector<1x8x256xf32>
    tpu.vector_store %arg4[%c0_34, %c0_35, %c0_36], %55 {strides = array<i32>} : memref<2x8x256xf32, #tpu.memory_space<vmem>>, vector<1x8x256xf32>,
    %56 = vector.extract_strided_slice %51 {offsets = [0, 256], sizes = [8, 256], strides = [1, 1]} : vector<8x512xf32> to vector<8x256xf32>
    %c1_37 = arith.constant 1 : index
    %c0_38 = arith.constant 0 : index
    %c0_39 = arith.constant 0 : index
    %57 = vector.load %arg4[%c1_37, %c0_38, %c0_39] : memref<2x8x256xf32, #tpu.memory_space<vmem>>, vector<1x8x256xf32>
    %58 = vector.shape_cast %57 : vector<1x8x256xf32> to vector<8x256xf32>
    %59 = vector.shape_cast %56 : vector<8x256xf32> to vector<1x8x256xf32>
    tpu.vector_store %arg4[%c1_37, %c0_38, %c0_39], %59 {strides = array<i32>} : memref<2x8x256xf32, #tpu.memory_space<vmem>>, vector<1x8x256xf32>,
    return
  }
  func.func @transform_0(%arg0: i32) -> (i32, i32, i32) {
    %c0_i32 = arith.constant 0 : i32
    %c0_i32_0 = arith.constant 0 : i32
    %c0_i32_1 = arith.constant 0 : i32
    %c0_i32_2 = arith.constant 0 : i32
    return %c0_i32, %c0_i32_0, %c0_i32_1 : i32, i32, i32
  }
  func.func @transform_1(%arg0: i32) -> (i32, i32, i32) {
    %c0_i32 = arith.constant 0 : i32
    %c0_i32_0 = arith.constant 0 : i32
    %c0_i32_1 = arith.constant 0 : i32
    %c0_i32_2 = arith.constant 0 : i32
    return %c0_i32, %c0_i32_0, %c0_i32_1 : i32, i32, i32
  }
  func.func @transform_2(%arg0: i32) -> (i32, i32) {
    %c0_i32 = arith.constant 0 : i32
    %c0_i32_0 = arith.constant 0 : i32
    %c0_i32_1 = arith.constant 0 : i32
    return %c0_i32, %c0_i32_0 : i32, i32
  }
  func.func @transform_3(%arg0: i32) -> (i32, i32, i32) {
    %c0_i32 = arith.constant 0 : i32
    %c0_i32_0 = arith.constant 0 : i32
    %c0_i32_1 = arith.constant 0 : i32
    %c0_i32_2 = arith.constant 0 : i32
    return %c0_i32, %c0_i32_0, %c0_i32_1 : i32, i32, i32
  }
}

</mosaic_0001>

<llo_original>
// kernel: conv2d_pallas.1
$region0: #{conv2d_pallas.1}
  #allocation0 [shape = 'u32[]', space=smem, size = 0x4, offset = 0x4, fixed_abs, tag = 'smem constant byte address 0x4 - core index']
  #allocation1 [shape = 'u32[144,128]{1,0:T(1,128)}', space=vmem, size = 0x12000, scoped, tag = 'internal scratch']
  %s0 = inlined_call_operand.vmem [shape: f32[2,3,256], index: 0, kind: input, shape index: {}]
  %s1 = inlined_call_operand.vmem [shape: f32[9,8,3], index: 1, kind: input, shape index: {}]
  %s2 = inlined_call_operand.vmem [shape: f32[8,1], index: 2, kind: input, shape index: {}]
  %s3 = inlined_call_operand.vmem [shape: f32[2,8,256], index: 3, kind: output, shape index: {}]
  %s4 = sld [smem:[#allocation0]]
  $region22: #{conv2d_pallas.1} parent=0
    _
  %s6 = ssub.s32 1, %s4
  %s7 = scalar_select 0, %s6, %s4
  // Predicated region
  $region2: #{conv2d_pallas.1} parent=0 // pred_check
    _
  $region3: #{conv2d_pallas.1} parent=0 // pred_check_branch
    %9 = sbr.rel (0) target = $region5
  $region4: #{conv2d_pallas.1} parent=0 // pred_region
    _
  $region5: #{conv2d_pallas.1} parent=0 // pred_fallthru
    _
  // Predicated region
  $region6: #{conv2d_pallas.1} parent=0 // pred_check
    _
  $region7: #{conv2d_pallas.1} parent=0 // pred_check_branch
    %11 = sbr.rel (0) target = $region9
  $region8: #{conv2d_pallas.1} parent=0 // pred_region
    _
  $region9: #{conv2d_pallas.1} parent=0 // pred_fallthru
    _
  // Predicated region
  $region10: #{conv2d_pallas.1} parent=0 // pred_check
    _
  $region11: #{conv2d_pallas.1} parent=0 // pred_check_branch
    %13 = sbr.rel (0) target = $region13
  $region12: #{conv2d_pallas.1} parent=0 // pred_region
    _
  $region13: #{conv2d_pallas.1} parent=0 // pred_fallthru
    _
  %v14 = vld [vmem:[%s0] sm:$0x77]
  %s15 = scalar_lea.vmem %s0, 8
  %v16 = vld [vmem:[%s15] sm:$0x77]
  %v18 = vcombine.high %v14, %v14
  %v21 = vcombine.high %v16, %v16
  %v23 = vld [vmem:[%s2] sm:$0xff]
  %25 = vset.pattern.permute.xlu0 0
  %26 = vperm.xlu0 %25, %v23
  %v27 = vpop.permute.xlu0 %26
  %v29 = vld [vmem:[%s1] sm:$0xff]
  %vm30 = vcmask 23552
  %v32 = vsel %vm30, %v29, 0
  %vm34 = vcmask 1042432
  %v35 = vsel %vm34, %v14, 0
  %v37 = vsel %vm34, %v18, 0
  %v39 = vsel %vm34, %v16, 0
  %v41 = vsel %vm34, %v21, 0
  %43 = vmatprep.subr.mxu0 0.0
  %44 = vmatpush1.msra.mxu0 0.0
  %45 = vmatprep.subr.mxu0 0.0
  %46 = vmatpush1.msra.mxu0 0.0
  %47 = vmatprep.subr.mxu0 0.0
  %48 = vmatpush1.msra.mxu0 0.0
  %49 = vmatprep.subr.mxu0 0.0
  %50 = vmatpush1.msra.mxu0 0.0
  %51 = vmatprep.subr.mxu0 0.0
  %52 = vmatpush1.msra.mxu0 0.0
  %53 = vmatprep.subr.mxu0 0.0
  %54 = vmatpush1.msra.mxu0 0.0
  %55 = vmatprep.subr.mxu0 0.0
  %56 = vmatpush1.msra.mxu0 0.0
  %57 = vmatprep.subr.mxu0 0.0
  %58 = vmatpush1.msra.mxu0 0.0
  %59 = vmatprep.subr.mxu0 0.0
  %60 = vmatpush1.msra.mxu0 0.0
  %61 = vmatprep.subr.mxu0 0.0
  %62 = vmatpush1.msra.mxu0 0.0
  %63 = vmatprep.subr.mxu0 0.0
  %64 = vmatpush1.msra.mxu0 0.0
  %65 = vmatprep.subr.mxu0 0.0
  %66 = vmatpush1.msra.mxu0 0.0
  %67 = vmatprep.subr.mxu0 0.0
  %68 = vmatpush1.msra.mxu0 0.0
  %69 = vmatprep.subr.mxu0 0.0
  %70 = vmatpush1.msra.mxu0 0.0
  %71 = vmatprep.subr.mxu0 0.0
  %72 = vmatpush1.msra.mxu0 0.0
  %73 = vmatprep.subr.mxu0 %v37
  %74 = vmatpush1.msra.mxu0 %v35
  %75 = vmatprep.subr.mxu0 0.0
  %76 = vmatpush2.msra.mxu0 0.0
  %77 = vmatprep.subr.mxu0 0.0
  %78 = vmatpush2.msra.mxu0 0.0
  %79 = vmatprep.subr.mxu0 0.0
  %80 = vmatpush2.msra.mxu0 0.0
  %81 = vmatprep.subr.mxu0 0.0
  %82 = vmatpush2.msra.mxu0 0.0
  %83 = vmatprep.subr.mxu0 0.0
  %84 = vmatpush2.msra.mxu0 0.0
  %85 = vmatprep.subr.mxu0 0.0
  %86 = vmatpush2.msra.mxu0 0.0
  %87 = vmatprep.subr.mxu0 0.0
  %88 = vmatpush2.msra.mxu0 0.0
  %89 = vmatprep.subr.mxu0 0.0
  %90 = vmatpush2.msra.mxu0 0.0
  %91 = vmatprep.subr.mxu0 0.0
  %92 = vmatpush2.msra.mxu0 0.0
  %93 = vmatprep.subr.mxu0 0.0
  %94 = vmatpush2.msra.mxu0 0.0
  %95 = vmatprep.subr.mxu0 0.0
  %96 = vmatpush2.msra.mxu0 0.0
  %97 = vmatprep.subr.mxu0 0.0
  %98 = vmatpush2.msra.mxu0 0.0
  %99 = vmatprep.subr.mxu0 0.0
  %100 = vmatpush2.msra.mxu0 0.0
  %101 = vmatprep.subr.mxu0 0.0
  %102 = vmatpush2.msra.mxu0 0.0
  %103 = vmatprep.subr.mxu0 0.0
  %104 = vmatpush2.msra.mxu0 0.0
  %105 = vmatprep.subr.mxu0 0.0
  %106 = vmatpush2.msra.mxu0 0.0
  %107 = vmatprep.mubr.f32.mxu0 0.0
  %108 = vmatmul.mubr.f32.gmra.mxu0 %v32
  %v109 = vpop.f32.mrf.mxu0
  %v110 = vadd.f32 0.0, %v109
  %v111 = vpop.f32.mrf.mxu0
  %v112 = vadd.f32 0.0, %v111
  %113 = vdwg.mxu0
  %114 = vmatprep.subr.mxu0 0.0
  %115 = vmatpush1.msra.mxu0 0.0
  %116 = vmatprep.subr.mxu0 0.0
  %117 = vmatpush1.msra.mxu0 0.0
  %118 = vmatprep.subr.mxu0 0.0
  %119 = vmatpush1.msra.mxu0 0.0
  %120 = vmatprep.subr.mxu0 0.0
  %121 = vmatpush1.msra.mxu0 0.0
  %122 = vmatprep.subr.mxu0 0.0
  %123 = vmatpush1.msra.mxu0 0.0
  %124 = vmatprep.subr.mxu0 0.0
  %125 = vmatpush1.msra.mxu0 0.0
  %126 = vmatprep.subr.mxu0 0.0
  %127 = vmatpush1.msra.mxu0 0.0
  %128 = vmatprep.subr.mxu0 0.0
  %129 = vmatpush1.msra.mxu0 0.0
  %130 = vmatprep.subr.mxu0 0.0
  %131 = vmatpush1.msra.mxu0 0.0
  %132 = vmatprep.subr.mxu0 0.0
  %133 = vmatpush1.msra.mxu0 0.0
  %134 = vmatprep.subr.mxu0 0.0
  %135 = vmatpush1.msra.mxu0 0.0
  %136 = vmatprep.subr.mxu0 0.0
  %137 = vmatpush1.msra.mxu0 0.0
  %138 = vmatprep.subr.mxu0 0.0
  %139 = vmatpush1.msra.mxu0 0.0
  %140 = vmatprep.subr.mxu0 0.0
  %141 = vmatpush1.msra.mxu0 0.0
  %142 = vmatprep.subr.mxu0 0.0
  %143 = vmatpush1.msra.mxu0 0.0
  %144 = vmatprep.subr.mxu0 %v41
  %145 = vmatpush1.msra.mxu0 %v39
  %146 = vmatprep.subr.mxu0 0.0
  %147 = vmatpush2.msra.mxu0 0.0
  %148 = vmatprep.subr.mxu0 0.0
  %149 = vmatpush2.msra.mxu0 0.0
  %150 = vmatprep.subr.mxu0 0.0
  %151 = vmatpush2.msra.mxu0 0.0
  %152 = vmatprep.subr.mxu0 0.0
  %153 = vmatpush2.msra.mxu0 0.0
  %154 = vmatprep.subr.mxu0 0.0
  %155 = vmatpush2.msra.mxu0 0.0
  %156 = vmatprep.subr.mxu0 0.0
  %157 = vmatpush2.msra.mxu0 0.0
  %158 = vmatprep.subr.mxu0 0.0
  %159 = vmatpush2.msra.mxu0 0.0
  %160 = vmatprep.subr.mxu0 0.0
  %161 = vmatpush2.msra.mxu0 0.0
  %162 = vmatprep.subr.mxu0 0.0
  %163 = vmatpush2.msra.mxu0 0.0
  %164 = vmatprep.subr.mxu0 0.0
  %165 = vmatpush2.msra.mxu0 0.0
  %166 = vmatprep.subr.mxu0 0.0
  %167 = vmatpush2.msra.mxu0 0.0
  %168 = vmatprep.subr.mxu0 0.0
  %169 = vmatpush2.msra.mxu0 0.0
  %170 = vmatprep.subr.mxu0 0.0
  %171 = vmatpush2.msra.mxu0 0.0
  %172 = vmatprep.subr.mxu0 0.0
  %173 = vmatpush2.msra.mxu0 0.0
  %174 = vmatprep.subr.mxu0 0.0
  %175 = vmatpush2.msra.mxu0 0.0
  %176 = vmatprep.subr.mxu0 0.0
  %177 = vmatpush2.msra.mxu0 0.0
  %178 = vmatprep.mubr.f32.mxu0 0.0
  %179 = vmatmul.mubr.f32.gmra.mxu0 %v32
  %v180 = vpop.f32.mrf.mxu0
  %v181 = vadd.f32 0.0, %v180
  %v182 = vpop.f32.mrf.mxu0
  %v183 = vadd.f32 0.0, %v182
  %184 = vdwg.mxu0
  %v185 = vadd.f32 %v27, %v110
  %v186 = vadd.f32 %v27, %v112
  %v187 = vadd.f32 %v27, %v181
  %v188 = vadd.f32 %v27, %v183
  %189 = vrot.lane.b32.xlu0 %v14, 127
  %v190 = vpop.permute.xlu0 %189
  %191 = vrot.lane.b32.xlu0 %v18, 127
  %v192 = vpop.permute.xlu0 %191
  %193 = vrot.lane.b32.xlu0 %v16, 127
  %v194 = vpop.permute.xlu0 %193
  %195 = vrot.lane.b32.xlu0 %v21, 127
  %v196 = vpop.permute.xlu0 %195
  %v197 = vlaneseq
  %v198 = vand.u32 %v197, 127
  %vm199 = vcmp.lt.s32.totalorder %v198, 127
  %v200 = vsel %vm199, %v194, %v196
  %v201 = vsel %vm199, %v192, %v194
  %v202 = vsel %vm199, %v190, %v192
  %v203 = vsel %vm199, %v196, %v190
  %s204 = scalar_lea.vmem %s1, 8
  %v205 = vld [vmem:[%s204] sm:$0xff]
  %v207 = vsel %vm30, %v205, 0
  %v210 = vsel %vm34, %v202, 0
  %v213 = vsel %vm34, %v201, 0
  %v216 = vsel %vm34, %v200, 0
  %v219 = vsel %vm34, %v203, 0
  %221 = vmatprep.subr.mxu0 0.0
  %222 = vmatpush1.msra.mxu0 0.0
  %223 = vmatprep.subr.mxu0 0.0
  %224 = vmatpush1.msra.mxu0 0.0
  %225 = vmatprep.subr.mxu0 0.0
  %226 = vmatpush1.msra.mxu0 0.0
  %227 = vmatprep.subr.mxu0 0.0
  %228 = vmatpush1.msra.mxu0 0.0
  %229 = vmatprep.subr.mxu0 0.0
  %230 = vmatpush1.msra.mxu0 0.0
  %231 = vmatprep.subr.mxu0 0.0
  %232 = vmatpush1.msra.mxu0 0.0
  %233 = vmatprep.subr.mxu0 0.0
  %234 = vmatpush1.msra.mxu0 0.0
  %235 = vmatprep.subr.mxu0 0.0
  %236 = vmatpush1.msra.mxu0 0.0
  %237 = vmatprep.subr.mxu0 0.0
  %238 = vmatpush1.msra.mxu0 0.0
  %239 = vmatprep.subr.mxu0 0.0
  %240 = vmatpush1.msra.mxu0 0.0
  %241 = vmatprep.subr.mxu0 0.0
  %242 = vmatpush1.msra.mxu0 0.0
  %243 = vmatprep.subr.mxu0 0.0
  %244 = vmatpush1.msra.mxu0 0.0
  %245 = vmatprep.subr.mxu0 0.0
  %246 = vmatpush1.msra.mxu0 0.0
  %247 = vmatprep.subr.mxu0 0.0
  %248 = vmatpush1.msra.mxu0 0.0
  %249 = vmatprep.subr.mxu0 0.0
  %250 = vmatpush1.msra.mxu0 0.0
  %251 = vmatprep.subr.mxu0 %v213
  %252 = vmatpush1.msra.mxu0 %v210
  %253 = vmatprep.subr.mxu0 0.0
  %254 = vmatpush2.msra.mxu0 0.0
  %255 = vmatprep.subr.mxu0 0.0
  %256 = vmatpush2.msra.mxu0 0.0
  %257 = vmatprep.subr.mxu0 0.0
  %258 = vmatpush2.msra.mxu0 0.0
  %259 = vmatprep.subr.mxu0 0.0
  %260 = vmatpush2.msra.mxu0 0.0
  %261 = vmatprep.subr.mxu0 0.0
  %262 = vmatpush2.msra.mxu0 0.0
  %263 = vmatprep.subr.mxu0 0.0
  %264 = vmatpush2.msra.mxu0 0.0
  %265 = vmatprep.subr.mxu0 0.0
  %266 = vmatpush2.msra.mxu0 0.0
  %267 = vmatprep.subr.mxu0 0.0
  %268 = vmatpush2.msra.mxu0 0.0
  %269 = vmatprep.subr.mxu0 0.0
  %270 = vmatpush2.msra.mxu0 0.0
  %271 = vmatprep.subr.mxu0 0.0
  %272 = vmatpush2.msra.mxu0 0.0
  %273 = vmatprep.subr.mxu0 0.0
  %274 = vmatpush2.msra.mxu0 0.0
  %275 = vmatprep.subr.mxu0 0.0
  %276 = vmatpush2.msra.mxu0 0.0
  %277 = vmatprep.subr.mxu0 0.0
  %278 = vmatpush2.msra.mxu0 0.0
  %279 = vmatprep.subr.mxu0 0.0
  %280 = vmatpush2.msra.mxu0 0.0
  %281 = vmatprep.subr.mxu0 0.0
  %282 = vmatpush2.msra.mxu0 0.0
  %283 = vmatprep.subr.mxu0 0.0
  %284 = vmatpush2.msra.mxu0 0.0
  %285 = vmatprep.mubr.f32.mxu0 0.0
  %286 = vmatmul.mubr.f32.gmra.mxu0 %v207
  %v287 = vpop.f32.mrf.mxu0
  %v288 = vadd.f32 0.0, %v287
  %v289 = vpop.f32.mrf.mxu0
  %v290 = vadd.f32 0.0, %v289
  %291 = vdwg.mxu0
  %292 = vmatprep.subr.mxu0 0.0
  %293 = vmatpush1.msra.mxu0 0.0
  %294 = vmatprep.subr.mxu0 0.0
  %295 = vmatpush1.msra.mxu0 0.0
  %296 = vmatprep.subr.mxu0 0.0
  %297 = vmatpush1.msra.mxu0 0.0
  %298 = vmatprep.subr.mxu0 0.0
  %299 = vmatpush1.msra.mxu0 0.0
  %300 = vmatprep.subr.mxu0 0.0
  %301 = vmatpush1.msra.mxu0 0.0
  %302 = vmatprep.subr.mxu0 0.0
  %303 = vmatpush1.msra.mxu0 0.0
  %304 = vmatprep.subr.mxu0 0.0
  %305 = vmatpush1.msra.mxu0 0.0
  %306 = vmatprep.subr.mxu0 0.0
  %307 = vmatpush1.msra.mxu0 0.0
  %308 = vmatprep.subr.mxu0 0.0
  %309 = vmatpush1.msra.mxu0 0.0
  %310 = vmatprep.subr.mxu0 0.0
  %311 = vmatpush1.msra.mxu0 0.0
  %312 = vmatprep.subr.mxu0 0.0
  %313 = vmatpush1.msra.mxu0 0.0
  %314 = vmatprep.subr.mxu0 0.0
  %315 = vmatpush1.msra.mxu0 0.0
  %316 = vmatprep.subr.mxu0 0.0
  %317 = vmatpush1.msra.mxu0 0.0
  %318 = vmatprep.subr.mxu0 0.0
  %319 = vmatpush1.msra.mxu0 0.0
  %320 = vmatprep.subr.mxu0 0.0
  %321 = vmatpush1.msra.mxu0 0.0
  %322 = vmatprep.subr.mxu0 %v219
  %323 = vmatpush1.msra.mxu0 %v216
  %324 = vmatprep.subr.mxu0 0.0
  %325 = vmatpush2.msra.mxu0 0.0
  %326 = vmatprep.subr.mxu0 0.0
  %327 = vmatpush2.msra.mxu0 0.0
  %328 = vmatprep.subr.mxu0 0.0
  %329 = vmatpush2.msra.mxu0 0.0
  %330 = vmatprep.subr.mxu0 0.0
  %331 = vmatpush2.msra.mxu0 0.0
  %332 = vmatprep.subr.mxu0 0.0
  %333 = vmatpush2.msra.mxu0 0.0
  %334 = vmatprep.subr.mxu0 0.0
  %335 = vmatpush2.msra.mxu0 0.0
  %336 = vmatprep.subr.mxu0 0.0
  %337 = vmatpush2.msra.mxu0 0.0
  %338 = vmatprep.subr.mxu0 0.0
  %339 = vmatpush2.msra.mxu0 0.0
  %340 = vmatprep.subr.mxu0 0.0
  %341 = vmatpush2.msra.mxu0 0.0
  %342 = vmatprep.subr.mxu0 0.0
  %343 = vmatpush2.msra.mxu0 0.0
  %344 = vmatprep.subr.mxu0 0.0
  %345 = vmatpush2.msra.mxu0 0.0
  %346 = vmatprep.subr.mxu0 0.0
  %347 = vmatpush2.msra.mxu0 0.0
  %348 = vmatprep.subr.mxu0 0.0
  %349 = vmatpush2.msra.mxu0 0.0
  %350 = vmatprep.subr.mxu0 0.0
  %351 = vmatpush2.msra.mxu0 0.0
  %352 = vmatprep.subr.mxu0 0.0
  %353 = vmatpush2.msra.mxu0 0.0
  %354 = vmatprep.subr.mxu0 0.0
  %355 = vmatpush2.msra.mxu0 0.0
  %356 = vmatprep.mubr.f32.mxu0 0.0
  %357 = vmatmul.mubr.f32.gmra.mxu0 %v207
  %v358 = vpop.f32.mrf.mxu0
  %v359 = vadd.f32 0.0, %v358
  %v360 = vpop.f32.mrf.mxu0
  %v361 = vadd.f32 0.0, %v360
  %362 = vdwg.mxu0
  %v363 = vadd.f32 %v185, %v288
  %v364 = vadd.f32 %v186, %v290
  %v365 = vadd.f32 %v187, %v359
  %v366 = vadd.f32 %v188, %v361
  %367 = vrot.lane.b32.xlu0 %v14, 126
  %v368 = vpop.permute.xlu0 %367
  %369 = vrot.lane.b32.xlu0 %v18, 126
  %v370 = vpop.permute.xlu0 %369
  %371 = vrot.lane.b32.xlu0 %v16, 126
  %v372 = vpop.permute.xlu0 %371
  %373 = vrot.lane.b32.xlu0 %v21, 126
  %v374 = vpop.permute.xlu0 %373
  %vm375 = vcmp.lt.s32.totalorder %v198, 126
  %v376 = vsel %vm375, %v372, %v374
  %v377 = vsel %vm375, %v370, %v372
  %v378 = vsel %vm375, %v368, %v370
  %v379 = vsel %vm375, %v374, %v368
  %s380 = scalar_lea.vmem %s1, 16
  %v381 = vld [vmem:[%s380] sm:$0xff]
  %v383 = vsel %vm30, %v381, 0
  %v386 = vsel %vm34, %v378, 0
  %v389 = vsel %vm34, %v377, 0
  %v392 = vsel %vm34, %v376, 0
  %v395 = vsel %vm34, %v379, 0
  %397 = vmatprep.subr.mxu0 0.0
  %398 = vmatpush1.msra.mxu0 0.0
  %399 = vmatprep.subr.mxu0 0.0
  %400 = vmatpush1.msra.mxu0 0.0
  %401 = vmatprep.subr.mxu0 0.0
  %402 = vmatpush1.msra.mxu0 0.0
  %403 = vmatprep.subr.mxu0 0.0
  %404 = vmatpush1.msra.mxu0 0.0
  %405 = vmatprep.subr.mxu0 0.0
  %406 = vmatpush1.msra.mxu0 0.0
  %407 = vmatprep.subr.mxu0 0.0
  %408 = vmatpush1.msra.mxu0 0.0
  %409 = vmatprep.subr.mxu0 0.0
  %410 = vmatpush1.msra.mxu0 0.0
  %411 = vmatprep.subr.mxu0 0.0
  %412 = vmatpush1.msra.mxu0 0.0
  %413 = vmatprep.subr.mxu0 0.0
  %414 = vmatpush1.msra.mxu0 0.0
  %415 = vmatprep.subr.mxu0 0.0
  %416 = vmatpush1.msra.mxu0 0.0
  %417 = vmatprep.subr.mxu0 0.0
  %418 = vmatpush1.msra.mxu0 0.0
  %419 = vmatprep.subr.mxu0 0.0
  %420 = vmatpush1.msra.mxu0 0.0
  %421 = vmatprep.subr.mxu0 0.0
  %422 = vmatpush1.msra.mxu0 0.0
  %423 = vmatprep.subr.mxu0 0.0
  %424 = vmatpush1.msra.mxu0 0.0
  %425 = vmatprep.subr.mxu0 0.0
  %426 = vmatpush1.msra.mxu0 0.0
  %427 = vmatprep.subr.mxu0 %v389
  %428 = vmatpush1.msra.mxu0 %v386
  %429 = vmatprep.subr.mxu0 0.0
  %430 = vmatpush2.msra.mxu0 0.0
  %431 = vmatprep.subr.mxu0 0.0
  %432 = vmatpush2.msra.mxu0 0.0
  %433 = vmatprep.subr.mxu0 0.0
  %434 = vmatpush2.msra.mxu0 0.0
  %435 = vmatprep.subr.mxu0 0.0
  %436 = vmatpush2.msra.mxu0 0.0
  %437 = vmatprep.subr.mxu0 0.0
  %438 = vmatpush2.msra.mxu0 0.0
  %439 = vmatprep.subr.mxu0 0.0
  %440 = vmatpush2.msra.mxu0 0.0
  %441 = vmatprep.subr.mxu0 0.0
  %442 = vmatpush2.msra.mxu0 0.0
  %443 = vmatprep.subr.mxu0 0.0
  %444 = vmatpush2.msra.mxu0 0.0
  %445 = vmatprep.subr.mxu0 0.0
  %446 = vmatpush2.msra.mxu0 0.0
  %447 = vmatprep.subr.mxu0 0.0
  %448 = vmatpush2.msra.mxu0 0.0
  %449 = vmatprep.subr.mxu0 0.0
  %450 = vmatpush2.msra.mxu0 0.0
  %451 = vmatprep.subr.mxu0 0.0
  %452 = vmatpush2.msra.mxu0 0.0
  %453 = vmatprep.subr.mxu0 0.0
  %454 = vmatpush2.msra.mxu0 0.0
  %455 = vmatprep.subr.mxu0 0.0
  %456 = vmatpush2.msra.mxu0 0.0
  %457 = vmatprep.subr.mxu0 0.0
  %458 = vmatpush2.msra.mxu0 0.0
  %459 = vmatprep.subr.mxu0 0.0
  %460 = vmatpush2.msra.mxu0 0.0
  %461 = vmatprep.mubr.f32.mxu0 0.0
  %462 = vmatmul.mubr.f32.gmra.mxu0 %v383
  %v463 = vpop.f32.mrf.mxu0
  %v464 = vadd.f32 0.0, %v463
  %v465 = vpop.f32.mrf.mxu0
  %v466 = vadd.f32 0.0, %v465
  %467 = vdwg.mxu0
  %468 = vmatprep.subr.mxu0 0.0
  %469 = vmatpush1.msra.mxu0 0.0
  %470 = vmatprep.subr.mxu0 0.0
  %471 = vmatpush1.msra.mxu0 0.0
  %472 = vmatprep.subr.mxu0 0.0
  %473 = vmatpush1.msra.mxu0 0.0
  %474 = vmatprep.subr.mxu0 0.0
  %475 = vmatpush1.msra.mxu0 0.0
  %476 = vmatprep.subr.mxu0 0.0
  %477 = vmatpush1.msra.mxu0 0.0
  %478 = vmatprep.subr.mxu0 0.0
  %479 = vmatpush1.msra.mxu0 0.0
  %480 = vmatprep.subr.mxu0 0.0
  %481 = vmatpush1.msra.mxu0 0.0
  %482 = vmatprep.subr.mxu0 0.0
  %483 = vmatpush1.msra.mxu0 0.0
  %484 = vmatprep.subr.mxu0 0.0
  %485 = vmatpush1.msra.mxu0 0.0
  %486 = vmatprep.subr.mxu0 0.0
  %487 = vmatpush1.msra.mxu0 0.0
  %488 = vmatprep.subr.mxu0 0.0
  %489 = vmatpush1.msra.mxu0 0.0
  %490 = vmatprep.subr.mxu0 0.0
  %491 = vmatpush1.msra.mxu0 0.0
  %492 = vmatprep.subr.mxu0 0.0
  %493 = vmatpush1.msra.mxu0 0.0
  %494 = vmatprep.subr.mxu0 0.0
  %495 = vmatpush1.msra.mxu0 0.0
  %496 = vmatprep.subr.mxu0 0.0
  %497 = vmatpush1.msra.mxu0 0.0
  %498 = vmatprep.subr.mxu0 %v395
  %499 = vmatpush1.msra.mxu0 %v392
  %500 = vmatprep.subr.mxu0 0.0
  %501 = vmatpush2.msra.mxu0 0.0
  %502 = vmatprep.subr.mxu0 0.0
  %503 = vmatpush2.msra.mxu0 0.0
  %504 = vmatprep.subr.mxu0 0.0
  %505 = vmatpush2.msra.mxu0 0.0
  %506 = vmatprep.subr.mxu0 0.0
  %507 = vmatpush2.msra.mxu0 0.0
  %508 = vmatprep.subr.mxu0 0.0
  %509 = vmatpush2.msra.mxu0 0.0
  %510 = vmatprep.subr.mxu0 0.0
  %511 = vmatpush2.msra.mxu0 0.0
  %512 = vmatprep.subr.mxu0 0.0
  %513 = vmatpush2.msra.mxu0 0.0
  %514 = vmatprep.subr.mxu0 0.0
  %515 = vmatpush2.msra.mxu0 0.0
  %516 = vmatprep.subr.mxu0 0.0
  %517 = vmatpush2.msra.mxu0 0.0
  %518 = vmatprep.subr.mxu0 0.0
  %519 = vmatpush2.msra.mxu0 0.0
  %520 = vmatprep.subr.mxu0 0.0
  %521 = vmatpush2.msra.mxu0 0.0
  %522 = vmatprep.subr.mxu0 0.0
  %523 = vmatpush2.msra.mxu0 0.0
  %524 = vmatprep.subr.mxu0 0.0
  %525 = vmatpush2.msra.mxu0 0.0
  %526 = vmatprep.subr.mxu0 0.0
  %527 = vmatpush2.msra.mxu0 0.0
  %528 = vmatprep.subr.mxu0 0.0
  %529 = vmatpush2.msra.mxu0 0.0
  %530 = vmatprep.subr.mxu0 0.0
  %531 = vmatpush2.msra.mxu0 0.0
  %532 = vmatprep.mubr.f32.mxu0 0.0
  %533 = vmatmul.mubr.f32.gmra.mxu0 %v383
  %v534 = vpop.f32.mrf.mxu0
  %v535 = vadd.f32 0.0, %v534
  %v536 = vpop.f32.mrf.mxu0
  %v537 = vadd.f32 0.0, %v536
  %538 = vdwg.mxu0
  %v539 = vadd.f32 %v363, %v464
  %v540 = vadd.f32 %v364, %v466
  %v541 = vadd.f32 %v365, %v535
  %v542 = vadd.f32 %v366, %v537
  %543 = vrot.lane.b32.xlu0 %v14, 112
  %v544 = vpop.permute.xlu0 %543
  %545 = vrot.lane.b32.xlu0 %v18, 112
  %v546 = vpop.permute.xlu0 %545
  %547 = vrot.lane.b32.xlu0 %v16, 112
  %v548 = vpop.permute.xlu0 %547
  %549 = vrot.lane.b32.xlu0 %v21, 112
  %v550 = vpop.permute.xlu0 %549
  %vm551 = vcmp.lt.s32.totalorder %v198, 112
  %v552 = vsel %vm551, %v548, %v550
  %v553 = vsel %vm551, %v546, %v548
  %v554 = vsel %vm551, %v544, %v546
  %v555 = vsel %vm551, %v550, %v544
  %s556 = scalar_lea.vmem %s1, 24
  %v557 = vld [vmem:[%s556] sm:$0xff]
  %v559 = vsel %vm30, %v557, 0
  %v562 = vsel %vm34, %v554, 0
  %v565 = vsel %vm34, %v553, 0
  %v568 = vsel %vm34, %v552, 0
  %v571 = vsel %vm34, %v555, 0
  %573 = vmatprep.subr.mxu0 0.0
  %574 = vmatpush1.msra.mxu0 0.0
  %575 = vmatprep.subr.mxu0 0.0
  %576 = vmatpush1.msra.mxu0 0.0
  %577 = vmatprep.subr.mxu0 0.0
  %578 = vmatpush1.msra.mxu0 0.0
  %579 = vmatprep.subr.mxu0 0.0
  %580 = vmatpush1.msra.mxu0 0.0
  %581 = vmatprep.subr.mxu0 0.0
  %582 = vmatpush1.msra.mxu0 0.0
  %583 = vmatprep.subr.mxu0 0.0
  %584 = vmatpush1.msra.mxu0 0.0
  %585 = vmatprep.subr.mxu0 0.0
  %586 = vmatpush1.msra.mxu0 0.0
  %587 = vmatprep.subr.mxu0 0.0
  %588 = vmatpush1.msra.mxu0 0.0
  %589 = vmatprep.subr.mxu0 0.0
  %590 = vmatpush1.msra.mxu0 0.0
  %591 = vmatprep.subr.mxu0 0.0
  %592 = vmatpush1.msra.mxu0 0.0
  %593 = vmatprep.subr.mxu0 0.0
  %594 = vmatpush1.msra.mxu0 0.0
  %595 = vmatprep.subr.mxu0 0.0
  %596 = vmatpush1.msra.mxu0 0.0
  %597 = vmatprep.subr.mxu0 0.0
  %598 = vmatpush1.msra.mxu0 0.0
  %599 = vmatprep.subr.mxu0 0.0
  %600 = vmatpush1.msra.mxu0 0.0
  %601 = vmatprep.subr.mxu0 0.0
  %602 = vmatpush1.msra.mxu0 0.0
  %603 = vmatprep.subr.mxu0 %v565
  %604 = vmatpush1.msra.mxu0 %v562
  %605 = vmatprep.subr.mxu0 0.0
  %606 = vmatpush2.msra.mxu0 0.0
  %607 = vmatprep.subr.mxu0 0.0
  %608 = vmatpush2.msra.mxu0 0.0
  %609 = vmatprep.subr.mxu0 0.0
  %610 = vmatpush2.msra.mxu0 0.0
  %611 = vmatprep.subr.mxu0 0.0
  %612 = vmatpush2.msra.mxu0 0.0
  %613 = vmatprep.subr.mxu0 0.0
  %614 = vmatpush2.msra.mxu0 0.0
  %615 = vmatprep.subr.mxu0 0.0
  %616 = vmatpush2.msra.mxu0 0.0
  %617 = vmatprep.subr.mxu0 0.0
  %618 = vmatpush2.msra.mxu0 0.0
  %619 = vmatprep.subr.mxu0 0.0
  %620 = vmatpush2.msra.mxu0 0.0
  %621 = vmatprep.subr.mxu0 0.0
  %622 = vmatpush2.msra.mxu0 0.0
  %623 = vmatprep.subr.mxu0 0.0
  %624 = vmatpush2.msra.mxu0 0.0
  %625 = vmatprep.subr.mxu0 0.0
  %626 = vmatpush2.msra.mxu0 0.0
  %627 = vmatprep.subr.mxu0 0.0
  %628 = vmatpush2.msra.mxu0 0.0
  %629 = vmatprep.subr.mxu0 0.0
  %630 = vmatpush2.msra.mxu0 0.0
  %631 = vmatprep.subr.mxu0 0.0
  %632 = vmatpush2.msra.mxu0 0.0
  %633 = vmatprep.subr.mxu0 0.0
  %634 = vmatpush2.msra.mxu0 0.0
  %635 = vmatprep.subr.mxu0 0.0
  %636 = vmatpush2.msra.mxu0 0.0
  %637 = vmatprep.mubr.f32.mxu0 0.0
  %638 = vmatmul.mubr.f32.gmra.mxu0 %v559
  %v639 = vpop.f32.mrf.mxu0
  %v640 = vadd.f32 0.0, %v639
  %v641 = vpop.f32.mrf.mxu0
  %v642 = vadd.f32 0.0, %v641
  %643 = vdwg.mxu0
  %644 = vmatprep.subr.mxu0 0.0
  %645 = vmatpush1.msra.mxu0 0.0
  %646 = vmatprep.subr.mxu0 0.0
  %647 = vmatpush1.msra.mxu0 0.0
  %648 = vmatprep.subr.mxu0 0.0
  %649 = vmatpush1.msra.mxu0 0.0
  %650 = vmatprep.subr.mxu0 0.0
  %651 = vmatpush1.msra.mxu0 0.0
  %652 = vmatprep.subr.mxu0 0.0
  %653 = vmatpush1.msra.mxu0 0.0
  %654 = vmatprep.subr.mxu0 0.0
  %655 = vmatpush1.msra.mxu0 0.0
  %656 = vmatprep.subr.mxu0 0.0
  %657 = vmatpush1.msra.mxu0 0.0
  %658 = vmatprep.subr.mxu0 0.0
  %659 = vmatpush1.msra.mxu0 0.0
  %660 = vmatprep.subr.mxu0 0.0
  %661 = vmatpush1.msra.mxu0 0.0
  %662 = vmatprep.subr.mxu0 0.0
  %663 = vmatpush1.msra.mxu0 0.0
  %664 = vmatprep.subr.mxu0 0.0
  %665 = vmatpush1.msra.mxu0 0.0
  %666 = vmatprep.subr.mxu0 0.0
  %667 = vmatpush1.msra.mxu0 0.0
  %668 = vmatprep.subr.mxu0 0.0
  %669 = vmatpush1.msra.mxu0 0.0
  %670 = vmatprep.subr.mxu0 0.0
  %671 = vmatpush1.msra.mxu0 0.0
  %672 = vmatprep.subr.mxu0 0.0
  %673 = vmatpush1.msra.mxu0 0.0
  %674 = vmatprep.subr.mxu0 %v571
  %675 = vmatpush1.msra.mxu0 %v568
  %676 = vmatprep.subr.mxu0 0.0
  %677 = vmatpush2.msra.mxu0 0.0
  %678 = vmatprep.subr.mxu0 0.0
  %679 = vmatpush2.msra.mxu0 0.0
  %680 = vmatprep.subr.mxu0 0.0
  %681 = vmatpush2.msra.mxu0 0.0
  %682 = vmatprep.subr.mxu0 0.0
  %683 = vmatpush2.msra.mxu0 0.0
  %684 = vmatprep.subr.mxu0 0.0
  %685 = vmatpush2.msra.mxu0 0.0
  %686 = vmatprep.subr.mxu0 0.0
  %687 = vmatpush2.msra.mxu0 0.0
  %688 = vmatprep.subr.mxu0 0.0
  %689 = vmatpush2.msra.mxu0 0.0
  %690 = vmatprep.subr.mxu0 0.0
  %691 = vmatpush2.msra.mxu0 0.0
  %692 = vmatprep.subr.mxu0 0.0
  %693 = vmatpush2.msra.mxu0 0.0
  %694 = vmatprep.subr.mxu0 0.0
  %695 = vmatpush2.msra.mxu0 0.0
  %696 = vmatprep.subr.mxu0 0.0
  %697 = vmatpush2.msra.mxu0 0.0
  %698 = vmatprep.subr.mxu0 0.0
  %699 = vmatpush2.msra.mxu0 0.0
  %700 = vmatprep.subr.mxu0 0.0
  %701 = vmatpush2.msra.mxu0 0.0
  %702 = vmatprep.subr.mxu0 0.0
  %703 = vmatpush2.msra.mxu0 0.0
  %704 = vmatprep.subr.mxu0 0.0
  %705 = vmatpush2.msra.mxu0 0.0
  %706 = vmatprep.subr.mxu0 0.0
  %707 = vmatpush2.msra.mxu0 0.0
  %708 = vmatprep.mubr.f32.mxu0 0.0
  %709 = vmatmul.mubr.f32.gmra.mxu0 %v559
  %v710 = vpop.f32.mrf.mxu0
  %v711 = vadd.f32 0.0, %v710
  %v712 = vpop.f32.mrf.mxu0
  %v713 = vadd.f32 0.0, %v712
  %714 = vdwg.mxu0
  %v715 = vadd.f32 %v539, %v640
  %v716 = vadd.f32 %v540, %v642
  %v717 = vadd.f32 %v541, %v711
  %v718 = vadd.f32 %v542, %v713
  %719 = vrot.lane.b32.xlu0 %v14, 111
  %v720 = vpop.permute.xlu0 %719
  %721 = vrot.lane.b32.xlu0 %v18, 111
  %v722 = vpop.permute.xlu0 %721
  %723 = vrot.lane.b32.xlu0 %v16, 111
  %v724 = vpop.permute.xlu0 %723
  %725 = vrot.lane.b32.xlu0 %v21, 111
  %v726 = vpop.permute.xlu0 %725
  %vm727 = vcmp.lt.s32.totalorder %v198, 111
  %v728 = vsel %vm727, %v724, %v726
  %v729 = vsel %vm727, %v722, %v724
  %v730 = vsel %vm727, %v720, %v722
  %v731 = vsel %vm727, %v726, %v720
  %s732 = scalar_lea.vmem %s1, 32
  %v733 = vld [vmem:[%s732] sm:$0xff]
  %v735 = vsel %vm30, %v733, 0
  %v738 = vsel %vm34, %v730, 0
  %v741 = vsel %vm34, %v729, 0
  %v744 = vsel %vm34, %v728, 0
  %v747 = vsel %vm34, %v731, 0
  %749 = vmatprep.subr.mxu0 0.0
  %750 = vmatpush1.msra.mxu0 0.0
  %751 = vmatprep.subr.mxu0 0.0
  %752 = vmatpush1.msra.mxu0 0.0
  %753 = vmatprep.subr.mxu0 0.0
  %754 = vmatpush1.msra.mxu0 0.0
  %755 = vmatprep.subr.mxu0 0.0
  %756 = vmatpush1.msra.mxu0 0.0
  %757 = vmatprep.subr.mxu0 0.0
  %758 = vmatpush1.msra.mxu0 0.0
  %759 = vmatprep.subr.mxu0 0.0
  %760 = vmatpush1.msra.mxu0 0.0
  %761 = vmatprep.subr.mxu0 0.0
  %762 = vmatpush1.msra.mxu0 0.0
  %763 = vmatprep.subr.mxu0 0.0
  %764 = vmatpush1.msra.mxu0 0.0
  %765 = vmatprep.subr.mxu0 0.0
  %766 = vmatpush1.msra.mxu0 0.0
  %767 = vmatprep.subr.mxu0 0.0
  %768 = vmatpush1.msra.mxu0 0.0
  %769 = vmatprep.subr.mxu0 0.0
  %770 = vmatpush1.msra.mxu0 0.0
  %771 = vmatprep.subr.mxu0 0.0
  %772 = vmatpush1.msra.mxu0 0.0
  %773 = vmatprep.subr.mxu0 0.0
  %774 = vmatpush1.msra.mxu0 0.0
  %775 = vmatprep.subr.mxu0 0.0
  %776 = vmatpush1.msra.mxu0 0.0
  %777 = vmatprep.subr.mxu0 0.0
  %778 = vmatpush1.msra.mxu0 0.0
  %779 = vmatprep.subr.mxu0 %v741
  %780 = vmatpush1.msra.mxu0 %v738
  %781 = vmatprep.subr.mxu0 0.0
  %782 = vmatpush2.msra.mxu0 0.0
  %783 = vmatprep.subr.mxu0 0.0
  %784 = vmatpush2.msra.mxu0 0.0
  %785 = vmatprep.subr.mxu0 0.0
  %786 = vmatpush2.msra.mxu0 0.0
  %787 = vmatprep.subr.mxu0 0.0
  %788 = vmatpush2.msra.mxu0 0.0
  %789 = vmatprep.subr.mxu0 0.0
  %790 = vmatpush2.msra.mxu0 0.0
  %791 = vmatprep.subr.mxu0 0.0
  %792 = vmatpush2.msra.mxu0 0.0
  %793 = vmatprep.subr.mxu0 0.0
  %794 = vmatpush2.msra.mxu0 0.0
  %795 = vmatprep.subr.mxu0 0.0
  %796 = vmatpush2.msra.mxu0 0.0
  %797 = vmatprep.subr.mxu0 0.0
  %798 = vmatpush2.msra.mxu0 0.0
  %799 = vmatprep.subr.mxu0 0.0
  %800 = vmatpush2.msra.mxu0 0.0
  %801 = vmatprep.subr.mxu0 0.0
  %802 = vmatpush2.msra.mxu0 0.0
  %803 = vmatprep.subr.mxu0 0.0
  %804 = vmatpush2.msra.mxu0 0.0
  %805 = vmatprep.subr.mxu0 0.0
  %806 = vmatpush2.msra.mxu0 0.0
  %807 = vmatprep.subr.mxu0 0.0
  %808 = vmatpush2.msra.mxu0 0.0
  %809 = vmatprep.subr.mxu0 0.0
  %810 = vmatpush2.msra.mxu0 0.0
  %811 = vmatprep.subr.mxu0 0.0
  %812 = vmatpush2.msra.mxu0 0.0
  %813 = vmatprep.mubr.f32.mxu0 0.0
  %814 = vmatmul.mubr.f32.gmra.mxu0 %v735
  %v815 = vpop.f32.mrf.mxu0
  %v816 = vadd.f32 0.0, %v815
  %v817 = vpop.f32.mrf.mxu0
  %v818 = vadd.f32 0.0, %v817
  %819 = vdwg.mxu0
  %820 = vmatprep.subr.mxu0 0.0
  %821 = vmatpush1.msra.mxu0 0.0
  %822 = vmatprep.subr.mxu0 0.0
  %823 = vmatpush1.msra.mxu0 0.0
  %824 = vmatprep.subr.mxu0 0.0
  %825 = vmatpush1.msra.mxu0 0.0
  %826 = vmatprep.subr.mxu0 0.0
  %827 = vmatpush1.msra.mxu0 0.0
  %828 = vmatprep.subr.mxu0 0.0
  %829 = vmatpush1.msra.mxu0 0.0
  %830 = vmatprep.subr.mxu0 0.0
  %831 = vmatpush1.msra.mxu0 0.0
  %832 = vmatprep.subr.mxu0 0.0
  %833 = vmatpush1.msra.mxu0 0.0
  %834 = vmatprep.subr.mxu0 0.0
  %835 = vmatpush1.msra.mxu0 0.0
  %836 = vmatprep.subr.mxu0 0.0
  %837 = vmatpush1.msra.mxu0 0.0
  %838 = vmatprep.subr.mxu0 0.0
  %839 = vmatpush1.msra.mxu0 0.0
  %840 = vmatprep.subr.mxu0 0.0
  %841 = vmatpush1.msra.mxu0 0.0
  %842 = vmatprep.subr.mxu0 0.0
  %843 = vmatpush1.msra.mxu0 0.0
  %844 = vmatprep.subr.mxu0 0.0
  %845 = vmatpush1.msra.mxu0 0.0
  %846 = vmatprep.subr.mxu0 0.0
  %847 = vmatpush1.msra.mxu0 0.0
  %848 = vmatprep.subr.mxu0 0.0
  %849 = vmatpush1.msra.mxu0 0.0
  %850 = vmatprep.subr.mxu0 %v747
  %851 = vmatpush1.msra.mxu0 %v744
  %852 = vmatprep.subr.mxu0 0.0
  %853 = vmatpush2.msra.mxu0 0.0
  %854 = vmatprep.subr.mxu0 0.0
  %855 = vmatpush2.msra.mxu0 0.0
  %856 = vmatprep.subr.mxu0 0.0
  %857 = vmatpush2.msra.mxu0 0.0
  %858 = vmatprep.subr.mxu0 0.0
  %859 = vmatpush2.msra.mxu0 0.0
  %860 = vmatprep.subr.mxu0 0.0
  %861 = vmatpush2.msra.mxu0 0.0
  %862 = vmatprep.subr.mxu0 0.0
  %863 = vmatpush2.msra.mxu0 0.0
  %864 = vmatprep.subr.mxu0 0.0
  %865 = vmatpush2.msra.mxu0 0.0
  %866 = vmatprep.subr.mxu0 0.0
  %867 = vmatpush2.msra.mxu0 0.0
  %868 = vmatprep.subr.mxu0 0.0
  %869 = vmatpush2.msra.mxu0 0.0
  %870 = vmatprep.subr.mxu0 0.0
  %871 = vmatpush2.msra.mxu0 0.0
  %872 = vmatprep.subr.mxu0 0.0
  %873 = vmatpush2.msra.mxu0 0.0
  %874 = vmatprep.subr.mxu0 0.0
  %875 = vmatpush2.msra.mxu0 0.0
  %876 = vmatprep.subr.mxu0 0.0
  %877 = vmatpush2.msra.mxu0 0.0
  %878 = vmatprep.subr.mxu0 0.0
  %879 = vmatpush2.msra.mxu0 0.0
  %880 = vmatprep.subr.mxu0 0.0
  %881 = vmatpush2.msra.mxu0 0.0
  %882 = vmatprep.subr.mxu0 0.0
  %883 = vmatpush2.msra.mxu0 0.0
  %884 = vmatprep.mubr.f32.mxu0 0.0
  %885 = vmatmul.mubr.f32.gmra.mxu0 %v735
  %v886 = vpop.f32.mrf.mxu0
  %v887 = vadd.f32 0.0, %v886
  %v888 = vpop.f32.mrf.mxu0
  %v889 = vadd.f32 0.0, %v888
  %890 = vdwg.mxu0
  %v891 = vadd.f32 %v715, %v816
  %v892 = vadd.f32 %v716, %v818
  %v893 = vadd.f32 %v717, %v887
  %v894 = vadd.f32 %v718, %v889
  %895 = vrot.lane.b32.xlu0 %v14, 110
  %v896 = vpop.permute.xlu0 %895
  %897 = vrot.lane.b32.xlu0 %v18, 110
  %v898 = vpop.permute.xlu0 %897
  %899 = vrot.lane.b32.xlu0 %v16, 110
  %v900 = vpop.permute.xlu0 %899
  %901 = vrot.lane.b32.xlu0 %v21, 110
  %v902 = vpop.permute.xlu0 %901
  %vm903 = vcmp.lt.s32.totalorder %v198, 110
  %v904 = vsel %vm903, %v900, %v902
  %v905 = vsel %vm903, %v898, %v900
  %v906 = vsel %vm903, %v896, %v898
  %v907 = vsel %vm903, %v902, %v896
  %s908 = scalar_lea.vmem %s1, 40
  %v909 = vld [vmem:[%s908] sm:$0xff]
  %v911 = vsel %vm30, %v909, 0
  %v914 = vsel %vm34, %v906, 0
  %v917 = vsel %vm34, %v905, 0
  %v920 = vsel %vm34, %v904, 0
  %v923 = vsel %vm34, %v907, 0
  %925 = vmatprep.subr.mxu0 0.0
  %926 = vmatpush1.msra.mxu0 0.0
  %927 = vmatprep.subr.mxu0 0.0
  %928 = vmatpush1.msra.mxu0 0.0
  %929 = vmatprep.subr.mxu0 0.0
  %930 = vmatpush1.msra.mxu0 0.0
  %931 = vmatprep.subr.mxu0 0.0
  %932 = vmatpush1.msra.mxu0 0.0
  %933 = vmatprep.subr.mxu0 0.0
  %934 = vmatpush1.msra.mxu0 0.0
  %935 = vmatprep.subr.mxu0 0.0
  %936 = vmatpush1.msra.mxu0 0.0
  %937 = vmatprep.subr.mxu0 0.0
  %938 = vmatpush1.msra.mxu0 0.0
  %939 = vmatprep.subr.mxu0 0.0
  %940 = vmatpush1.msra.mxu0 0.0
  %941 = vmatprep.subr.mxu0 0.0
  %942 = vmatpush1.msra.mxu0 0.0
  %943 = vmatprep.subr.mxu0 0.0
  %944 = vmatpush1.msra.mxu0 0.0
  %945 = vmatprep.subr.mxu0 0.0
  %946 = vmatpush1.msra.mxu0 0.0
  %947 = vmatprep.subr.mxu0 0.0
  %948 = vmatpush1.msra.mxu0 0.0
  %949 = vmatprep.subr.mxu0 0.0
  %950 = vmatpush1.msra.mxu0 0.0
  %951 = vmatprep.subr.mxu0 0.0
  %952 = vmatpush1.msra.mxu0 0.0
  %953 = vmatprep.subr.mxu0 0.0
  %954 = vmatpush1.msra.mxu0 0.0
  %955 = vmatprep.subr.mxu0 %v917
  %956 = vmatpush1.msra.mxu0 %v914
  %957 = vmatprep.subr.mxu0 0.0
  %958 = vmatpush2.msra.mxu0 0.0
  %959 = vmatprep.subr.mxu0 0.0
  %960 = vmatpush2.msra.mxu0 0.0
  %961 = vmatprep.subr.mxu0 0.0
  %962 = vmatpush2.msra.mxu0 0.0
  %963 = vmatprep.subr.mxu0 0.0
  %964 = vmatpush2.msra.mxu0 0.0
  %965 = vmatprep.subr.mxu0 0.0
  %966 = vmatpush2.msra.mxu0 0.0
  %967 = vmatprep.subr.mxu0 0.0
  %968 = vmatpush2.msra.mxu0 0.0
  %969 = vmatprep.subr.mxu0 0.0
  %970 = vmatpush2.msra.mxu0 0.0
  %971 = vmatprep.subr.mxu0 0.0
  %972 = vmatpush2.msra.mxu0 0.0
  %973 = vmatprep.subr.mxu0 0.0
  %974 = vmatpush2.msra.mxu0 0.0
  %975 = vmatprep.subr.mxu0 0.0
  %976 = vmatpush2.msra.mxu0 0.0
  %977 = vmatprep.subr.mxu0 0.0
  %978 = vmatpush2.msra.mxu0 0.0
  %979 = vmatprep.subr.mxu0 0.0
  %980 = vmatpush2.msra.mxu0 0.0
  %981 = vmatprep.subr.mxu0 0.0
  %982 = vmatpush2.msra.mxu0 0.0
  %983 = vmatprep.subr.mxu0 0.0
  %984 = vmatpush2.msra.mxu0 0.0
  %985 = vmatprep.subr.mxu0 0.0
  %986 = vmatpush2.msra.mxu0 0.0
  %987 = vmatprep.subr.mxu0 0.0
  %988 = vmatpush2.msra.mxu0 0.0
  %989 = vmatprep.mubr.f32.mxu0 0.0
  %990 = vmatmul.mubr.f32.gmra.mxu0 %v911
  %v991 = vpop.f32.mrf.mxu0
  %v992 = vadd.f32 0.0, %v991
  %v993 = vpop.f32.mrf.mxu0
  %v994 = vadd.f32 0.0, %v993
  %995 = vdwg.mxu0
  %996 = vmatprep.subr.mxu0 0.0
  %997 = vmatpush1.msra.mxu0 0.0
  %998 = vmatprep.subr.mxu0 0.0
  %999 = vmatpush1.msra.mxu0 0.0
  %1000 = vmatprep.subr.mxu0 0.0
  %1001 = vmatpush1.msra.mxu0 0.0
  %1002 = vmatprep.subr.mxu0 0.0
  %1003 = vmatpush1.msra.mxu0 0.0
  %1004 = vmatprep.subr.mxu0 0.0
  %1005 = vmatpush1.msra.mxu0 0.0
  %1006 = vmatprep.subr.mxu0 0.0
  %1007 = vmatpush1.msra.mxu0 0.0
  %1008 = vmatprep.subr.mxu0 0.0
  %1009 = vmatpush1.msra.mxu0 0.0
  %1010 = vmatprep.subr.mxu0 0.0
  %1011 = vmatpush1.msra.mxu0 0.0
  %1012 = vmatprep.subr.mxu0 0.0
  %1013 = vmatpush1.msra.mxu0 0.0
  %1014 = vmatprep.subr.mxu0 0.0
  %1015 = vmatpush1.msra.mxu0 0.0
  %1016 = vmatprep.subr.mxu0 0.0
  %1017 = vmatpush1.msra.mxu0 0.0
  %1018 = vmatprep.subr.mxu0 0.0
  %1019 = vmatpush1.msra.mxu0 0.0
  %1020 = vmatprep.subr.mxu0 0.0
  %1021 = vmatpush1.msra.mxu0 0.0
  %1022 = vmatprep.subr.mxu0 0.0
  %1023 = vmatpush1.msra.mxu0 0.0
  %1024 = vmatprep.subr.mxu0 0.0
  %1025 = vmatpush1.msra.mxu0 0.0
  %1026 = vmatprep.subr.mxu0 %v923
  %1027 = vmatpush1.msra.mxu0 %v920
  %1028 = vmatprep.subr.mxu0 0.0
  %1029 = vmatpush2.msra.mxu0 0.0
  %1030 = vmatprep.subr.mxu0 0.0
  %1031 = vmatpush2.msra.mxu0 0.0
  %1032 = vmatprep.subr.mxu0 0.0
  %1033 = vmatpush2.msra.mxu0 0.0
  %1034 = vmatprep.subr.mxu0 0.0
  %1035 = vmatpush2.msra.mxu0 0.0
  %1036 = vmatprep.subr.mxu0 0.0
  %1037 = vmatpush2.msra.mxu0 0.0
  %1038 = vmatprep.subr.mxu0 0.0
  %1039 = vmatpush2.msra.mxu0 0.0
  %1040 = vmatprep.subr.mxu0 0.0
  %1041 = vmatpush2.msra.mxu0 0.0
  %1042 = vmatprep.subr.mxu0 0.0
  %1043 = vmatpush2.msra.mxu0 0.0
  %1044 = vmatprep.subr.mxu0 0.0
  %1045 = vmatpush2.msra.mxu0 0.0
  %1046 = vmatprep.subr.mxu0 0.0
  %1047 = vmatpush2.msra.mxu0 0.0
  %1048 = vmatprep.subr.mxu0 0.0
  %1049 = vmatpush2.msra.mxu0 0.0
  %1050 = vmatprep.subr.mxu0 0.0
  %1051 = vmatpush2.msra.mxu0 0.0
  %1052 = vmatprep.subr.mxu0 0.0
  %1053 = vmatpush2.msra.mxu0 0.0
  %1054 = vmatprep.subr.mxu0 0.0
  %1055 = vmatpush2.msra.mxu0 0.0
  %1056 = vmatprep.subr.mxu0 0.0
  %1057 = vmatpush2.msra.mxu0 0.0
  %1058 = vmatprep.subr.mxu0 0.0
  %1059 = vmatpush2.msra.mxu0 0.0
  %1060 = vmatprep.mubr.f32.mxu0 0.0
  %1061 = vmatmul.mubr.f32.gmra.mxu0 %v911
  %v1062 = vpop.f32.mrf.mxu0
  %v1063 = vadd.f32 0.0, %v1062
  %v1064 = vpop.f32.mrf.mxu0
  %v1065 = vadd.f32 0.0, %v1064
  %1066 = vdwg.mxu0
  %v1067 = vadd.f32 %v891, %v992
  %v1068 = vadd.f32 %v892, %v994
  %v1069 = vadd.f32 %v893, %v1063
  %v1070 = vadd.f32 %v894, %v1065
  %1071 = vrot.lane.b32.xlu0 %v14, 96
  %v1072 = vpop.permute.xlu0 %1071
  %1073 = vrot.lane.b32.xlu0 %v18, 96
  %v1074 = vpop.permute.xlu0 %1073
  %1075 = vrot.lane.b32.xlu0 %v16, 96
  %v1076 = vpop.permute.xlu0 %1075
  %1077 = vrot.lane.b32.xlu0 %v21, 96
  %v1078 = vpop.permute.xlu0 %1077
  %vm1079 = vcmp.lt.s32.totalorder %v198, 96
  %v1080 = vsel %vm1079, %v1076, %v1078
  %v1081 = vsel %vm1079, %v1074, %v1076
  %v1082 = vsel %vm1079, %v1072, %v1074
  %v1083 = vsel %vm1079, %v1078, %v1072
  %s1084 = scalar_lea.vmem %s1, 48
  %v1085 = vld [vmem:[%s1084] sm:$0xff]
  %v1087 = vsel %vm30, %v1085, 0
  %v1090 = vsel %vm34, %v1082, 0
  %v1093 = vsel %vm34, %v1081, 0
  %v1096 = vsel %vm34, %v1080, 0
  %v1099 = vsel %vm34, %v1083, 0
  %1101 = vmatprep.subr.mxu0 0.0
  %1102 = vmatpush1.msra.mxu0 0.0
  %1103 = vmatprep.subr.mxu0 0.0
  %1104 = vmatpush1.msra.mxu0 0.0
  %1105 = vmatprep.subr.mxu0 0.0
  %1106 = vmatpush1.msra.mxu0 0.0
  %1107 = vmatprep.subr.mxu0 0.0
  %1108 = vmatpush1.msra.mxu0 0.0
  %1109 = vmatprep.subr.mxu0 0.0
  %1110 = vmatpush1.msra.mxu0 0.0
  %1111 = vmatprep.subr.mxu0 0.0
  %1112 = vmatpush1.msra.mxu0 0.0
  %1113 = vmatprep.subr.mxu0 0.0
  %1114 = vmatpush1.msra.mxu0 0.0
  %1115 = vmatprep.subr.mxu0 0.0
  %1116 = vmatpush1.msra.mxu0 0.0
  %1117 = vmatprep.subr.mxu0 0.0
  %1118 = vmatpush1.msra.mxu0 0.0
  %1119 = vmatprep.subr.mxu0 0.0
  %1120 = vmatpush1.msra.mxu0 0.0
  %1121 = vmatprep.subr.mxu0 0.0
  %1122 = vmatpush1.msra.mxu0 0.0
  %1123 = vmatprep.subr.mxu0 0.0
  %1124 = vmatpush1.msra.mxu0 0.0
  %1125 = vmatprep.subr.mxu0 0.0
  %1126 = vmatpush1.msra.mxu0 0.0
  %1127 = vmatprep.subr.mxu0 0.0
  %1128 = vmatpush1.msra.mxu0 0.0
  %1129 = vmatprep.subr.mxu0 0.0
  %1130 = vmatpush1.msra.mxu0 0.0
  %1131 = vmatprep.subr.mxu0 %v1093
  %1132 = vmatpush1.msra.mxu0 %v1090
  %1133 = vmatprep.subr.mxu0 0.0
  %1134 = vmatpush2.msra.mxu0 0.0
  %1135 = vmatprep.subr.mxu0 0.0
  %1136 = vmatpush2.msra.mxu0 0.0
  %1137 = vmatprep.subr.mxu0 0.0
  %1138 = vmatpush2.msra.mxu0 0.0
  %1139 = vmatprep.subr.mxu0 0.0
  %1140 = vmatpush2.msra.mxu0 0.0
  %1141 = vmatprep.subr.mxu0 0.0
  %1142 = vmatpush2.msra.mxu0 0.0
  %1143 = vmatprep.subr.mxu0 0.0
  %1144 = vmatpush2.msra.mxu0 0.0
  %1145 = vmatprep.subr.mxu0 0.0
  %1146 = vmatpush2.msra.mxu0 0.0
  %1147 = vmatprep.subr.mxu0 0.0
  %1148 = vmatpush2.msra.mxu0 0.0
  %1149 = vmatprep.subr.mxu0 0.0
  %1150 = vmatpush2.msra.mxu0 0.0
  %1151 = vmatprep.subr.mxu0 0.0
  %1152 = vmatpush2.msra.mxu0 0.0
  %1153 = vmatprep.subr.mxu0 0.0
  %1154 = vmatpush2.msra.mxu0 0.0
  %1155 = vmatprep.subr.mxu0 0.0
  %1156 = vmatpush2.msra.mxu0 0.0
  %1157 = vmatprep.subr.mxu0 0.0
  %1158 = vmatpush2.msra.mxu0 0.0
  %1159 = vmatprep.subr.mxu0 0.0
  %1160 = vmatpush2.msra.mxu0 0.0
  %1161 = vmatprep.subr.mxu0 0.0
  %1162 = vmatpush2.msra.mxu0 0.0
  %1163 = vmatprep.subr.mxu0 0.0
  %1164 = vmatpush2.msra.mxu0 0.0
  %1165 = vmatprep.mubr.f32.mxu0 0.0
  %1166 = vmatmul.mubr.f32.gmra.mxu0 %v1087
  %v1167 = vpop.f32.mrf.mxu0
  %v1168 = vadd.f32 0.0, %v1167
  %v1169 = vpop.f32.mrf.mxu0
  %v1170 = vadd.f32 0.0, %v1169
  %1171 = vdwg.mxu0
  %1172 = vmatprep.subr.mxu0 0.0
  %1173 = vmatpush1.msra.mxu0 0.0
  %1174 = vmatprep.subr.mxu0 0.0
  %1175 = vmatpush1.msra.mxu0 0.0
  %1176 = vmatprep.subr.mxu0 0.0
  %1177 = vmatpush1.msra.mxu0 0.0
  %1178 = vmatprep.subr.mxu0 0.0
  %1179 = vmatpush1.msra.mxu0 0.0
  %1180 = vmatprep.subr.mxu0 0.0
  %1181 = vmatpush1.msra.mxu0 0.0
  %1182 = vmatprep.subr.mxu0 0.0
  %1183 = vmatpush1.msra.mxu0 0.0
  %1184 = vmatprep.subr.mxu0 0.0
  %1185 = vmatpush1.msra.mxu0 0.0
  %1186 = vmatprep.subr.mxu0 0.0
  %1187 = vmatpush1.msra.mxu0 0.0
  %1188 = vmatprep.subr.mxu0 0.0
  %1189 = vmatpush1.msra.mxu0 0.0
  %1190 = vmatprep.subr.mxu0 0.0
  %1191 = vmatpush1.msra.mxu0 0.0
  %1192 = vmatprep.subr.mxu0 0.0
  %1193 = vmatpush1.msra.mxu0 0.0
  %1194 = vmatprep.subr.mxu0 0.0
  %1195 = vmatpush1.msra.mxu0 0.0
  %1196 = vmatprep.subr.mxu0 0.0
  %1197 = vmatpush1.msra.mxu0 0.0
  %1198 = vmatprep.subr.mxu0 0.0
  %1199 = vmatpush1.msra.mxu0 0.0
  %1200 = vmatprep.subr.mxu0 0.0
  %1201 = vmatpush1.msra.mxu0 0.0
  %1202 = vmatprep.subr.mxu0 %v1099
  %1203 = vmatpush1.msra.mxu0 %v1096
  %1204 = vmatprep.subr.mxu0 0.0
  %1205 = vmatpush2.msra.mxu0 0.0
  %1206 = vmatprep.subr.mxu0 0.0
  %1207 = vmatpush2.msra.mxu0 0.0
  %1208 = vmatprep.subr.mxu0 0.0
  %1209 = vmatpush2.msra.mxu0 0.0
  %1210 = vmatprep.subr.mxu0 0.0
  %1211 = vmatpush2.msra.mxu0 0.0
  %1212 = vmatprep.subr.mxu0 0.0
  %1213 = vmatpush2.msra.mxu0 0.0
  %1214 = vmatprep.subr.mxu0 0.0
  %1215 = vmatpush2.msra.mxu0 0.0
  %1216 = vmatprep.subr.mxu0 0.0
  %1217 = vmatpush2.msra.mxu0 0.0
  %1218 = vmatprep.subr.mxu0 0.0
  %1219 = vmatpush2.msra.mxu0 0.0
  %1220 = vmatprep.subr.mxu0 0.0
  %1221 = vmatpush2.msra.mxu0 0.0
  %1222 = vmatprep.subr.mxu0 0.0
  %1223 = vmatpush2.msra.mxu0 0.0
  %1224 = vmatprep.subr.mxu0 0.0
  %1225 = vmatpush2.msra.mxu0 0.0
  %1226 = vmatprep.subr.mxu0 0.0
  %1227 = vmatpush2.msra.mxu0 0.0
  %1228 = vmatprep.subr.mxu0 0.0
  %1229 = vmatpush2.msra.mxu0 0.0
  %1230 = vmatprep.subr.mxu0 0.0
  %1231 = vmatpush2.msra.mxu0 0.0
  %1232 = vmatprep.subr.mxu0 0.0
  %1233 = vmatpush2.msra.mxu0 0.0
  %1234 = vmatprep.subr.mxu0 0.0
  %1235 = vmatpush2.msra.mxu0 0.0
  %1236 = vmatprep.mubr.f32.mxu0 0.0
  %1237 = vmatmul.mubr.f32.gmra.mxu0 %v1087
  %v1238 = vpop.f32.mrf.mxu0
  %v1239 = vadd.f32 0.0, %v1238
  %v1240 = vpop.f32.mrf.mxu0
  %v1241 = vadd.f32 0.0, %v1240
  %1242 = vdwg.mxu0
  %v1243 = vadd.f32 %v1067, %v1168
  %v1244 = vadd.f32 %v1068, %v1170
  %v1245 = vadd.f32 %v1069, %v1239
  %v1246 = vadd.f32 %v1070, %v1241
  %1247 = vrot.lane.b32.xlu0 %v14, 95
  %v1248 = vpop.permute.xlu0 %1247
  %1249 = vrot.lane.b32.xlu0 %v18, 95
  %v1250 = vpop.permute.xlu0 %1249
  %1251 = vrot.lane.b32.xlu0 %v16, 95
  %v1252 = vpop.permute.xlu0 %1251
  %1253 = vrot.lane.b32.xlu0 %v21, 95
  %v1254 = vpop.permute.xlu0 %1253
  %vm1255 = vcmp.lt.s32.totalorder %v198, 95
  %v1256 = vsel %vm1255, %v1252, %v1254
  %v1257 = vsel %vm1255, %v1250, %v1252
  %v1258 = vsel %vm1255, %v1248, %v1250
  %v1259 = vsel %vm1255, %v1254, %v1248
  %s1260 = scalar_lea.vmem %s1, 56
  %v1261 = vld [vmem:[%s1260] sm:$0xff]
  %v1263 = vsel %vm30, %v1261, 0
  %v1266 = vsel %vm34, %v1258, 0
  %v1269 = vsel %vm34, %v1257, 0
  %v1272 = vsel %vm34, %v1256, 0
  %v1275 = vsel %vm34, %v1259, 0
  %1277 = vmatprep.subr.mxu0 0.0
  %1278 = vmatpush1.msra.mxu0 0.0
  %1279 = vmatprep.subr.mxu0 0.0
  %1280 = vmatpush1.msra.mxu0 0.0
  %1281 = vmatprep.subr.mxu0 0.0
  %1282 = vmatpush1.msra.mxu0 0.0
  %1283 = vmatprep.subr.mxu0 0.0
  %1284 = vmatpush1.msra.mxu0 0.0
  %1285 = vmatprep.subr.mxu0 0.0
  %1286 = vmatpush1.msra.mxu0 0.0
  %1287 = vmatprep.subr.mxu0 0.0
  %1288 = vmatpush1.msra.mxu0 0.0
  %1289 = vmatprep.subr.mxu0 0.0
  %1290 = vmatpush1.msra.mxu0 0.0
  %1291 = vmatprep.subr.mxu0 0.0
  %1292 = vmatpush1.msra.mxu0 0.0
  %1293 = vmatprep.subr.mxu0 0.0
  %1294 = vmatpush1.msra.mxu0 0.0
  %1295 = vmatprep.subr.mxu0 0.0
  %1296 = vmatpush1.msra.mxu0 0.0
  %1297 = vmatprep.subr.mxu0 0.0
  %1298 = vmatpush1.msra.mxu0 0.0
  %1299 = vmatprep.subr.mxu0 0.0
  %1300 = vmatpush1.msra.mxu0 0.0
  %1301 = vmatprep.subr.mxu0 0.0
  %1302 = vmatpush1.msra.mxu0 0.0
  %1303 = vmatprep.subr.mxu0 0.0
  %1304 = vmatpush1.msra.mxu0 0.0
  %1305 = vmatprep.subr.mxu0 0.0
  %1306 = vmatpush1.msra.mxu0 0.0
  %1307 = vmatprep.subr.mxu0 %v1269
  %1308 = vmatpush1.msra.mxu0 %v1266
  %1309 = vmatprep.subr.mxu0 0.0
  %1310 = vmatpush2.msra.mxu0 0.0
  %1311 = vmatprep.subr.mxu0 0.0
  %1312 = vmatpush2.msra.mxu0 0.0
  %1313 = vmatprep.subr.mxu0 0.0
  %1314 = vmatpush2.msra.mxu0 0.0
  %1315 = vmatprep.subr.mxu0 0.0
  %1316 = vmatpush2.msra.mxu0 0.0
  %1317 = vmatprep.subr.mxu0 0.0
  %1318 = vmatpush2.msra.mxu0 0.0
  %1319 = vmatprep.subr.mxu0 0.0
  %1320 = vmatpush2.msra.mxu0 0.0
  %1321 = vmatprep.subr.mxu0 0.0
  %1322 = vmatpush2.msra.mxu0 0.0
  %1323 = vmatprep.subr.mxu0 0.0
  %1324 = vmatpush2.msra.mxu0 0.0
  %1325 = vmatprep.subr.mxu0 0.0
  %1326 = vmatpush2.msra.mxu0 0.0
  %1327 = vmatprep.subr.mxu0 0.0
  %1328 = vmatpush2.msra.mxu0 0.0
  %1329 = vmatprep.subr.mxu0 0.0
  %1330 = vmatpush2.msra.mxu0 0.0
  %1331 = vmatprep.subr.mxu0 0.0
  %1332 = vmatpush2.msra.mxu0 0.0
  %1333 = vmatprep.subr.mxu0 0.0
  %1334 = vmatpush2.msra.mxu0 0.0
  %1335 = vmatprep.subr.mxu0 0.0
  %1336 = vmatpush2.msra.mxu0 0.0
  %1337 = vmatprep.subr.mxu0 0.0
  %1338 = vmatpush2.msra.mxu0 0.0
  %1339 = vmatprep.subr.mxu0 0.0
  %1340 = vmatpush2.msra.mxu0 0.0
  %1341 = vmatprep.mubr.f32.mxu0 0.0
  %1342 = vmatmul.mubr.f32.gmra.mxu0 %v1263
  %v1343 = vpop.f32.mrf.mxu0
  %v1344 = vadd.f32 0.0, %v1343
  %v1345 = vpop.f32.mrf.mxu0
  %v1346 = vadd.f32 0.0, %v1345
  %1347 = vdwg.mxu0
  %1348 = vmatprep.subr.mxu0 0.0
  %1349 = vmatpush1.msra.mxu0 0.0
  %1350 = vmatprep.subr.mxu0 0.0
  %1351 = vmatpush1.msra.mxu0 0.0
  %1352 = vmatprep.subr.mxu0 0.0
  %1353 = vmatpush1.msra.mxu0 0.0
  %1354 = vmatprep.subr.mxu0 0.0
  %1355 = vmatpush1.msra.mxu0 0.0
  %1356 = vmatprep.subr.mxu0 0.0
  %1357 = vmatpush1.msra.mxu0 0.0
  %1358 = vmatprep.subr.mxu0 0.0
  %1359 = vmatpush1.msra.mxu0 0.0
  %1360 = vmatprep.subr.mxu0 0.0
  %1361 = vmatpush1.msra.mxu0 0.0
  %1362 = vmatprep.subr.mxu0 0.0
  %1363 = vmatpush1.msra.mxu0 0.0
  %1364 = vmatprep.subr.mxu0 0.0
  %1365 = vmatpush1.msra.mxu0 0.0
  %1366 = vmatprep.subr.mxu0 0.0
  %1367 = vmatpush1.msra.mxu0 0.0
  %1368 = vmatprep.subr.mxu0 0.0
  %1369 = vmatpush1.msra.mxu0 0.0
  %1370 = vmatprep.subr.mxu0 0.0
  %1371 = vmatpush1.msra.mxu0 0.0
  %1372 = vmatprep.subr.mxu0 0.0
  %1373 = vmatpush1.msra.mxu0 0.0
  %1374 = vmatprep.subr.mxu0 0.0
  %1375 = vmatpush1.msra.mxu0 0.0
  %1376 = vmatprep.subr.mxu0 0.0
  %1377 = vmatpush1.msra.mxu0 0.0
  %1378 = vmatprep.subr.mxu0 %v1275
  %1379 = vmatpush1.msra.mxu0 %v1272
  %1380 = vmatprep.subr.mxu0 0.0
  %1381 = vmatpush2.msra.mxu0 0.0
  %1382 = vmatprep.subr.mxu0 0.0
  %1383 = vmatpush2.msra.mxu0 0.0
  %1384 = vmatprep.subr.mxu0 0.0
  %1385 = vmatpush2.msra.mxu0 0.0
  %1386 = vmatprep.subr.mxu0 0.0
  %1387 = vmatpush2.msra.mxu0 0.0
  %1388 = vmatprep.subr.mxu0 0.0
  %1389 = vmatpush2.msra.mxu0 0.0
  %1390 = vmatprep.subr.mxu0 0.0
  %1391 = vmatpush2.msra.mxu0 0.0
  %1392 = vmatprep.subr.mxu0 0.0
  %1393 = vmatpush2.msra.mxu0 0.0
  %1394 = vmatprep.subr.mxu0 0.0
  %1395 = vmatpush2.msra.mxu0 0.0
  %1396 = vmatprep.subr.mxu0 0.0
  %1397 = vmatpush2.msra.mxu0 0.0
  %1398 = vmatprep.subr.mxu0 0.0
  %1399 = vmatpush2.msra.mxu0 0.0
  %1400 = vmatprep.subr.mxu0 0.0
  %1401 = vmatpush2.msra.mxu0 0.0
  %1402 = vmatprep.subr.mxu0 0.0
  %1403 = vmatpush2.msra.mxu0 0.0
  %1404 = vmatprep.subr.mxu0 0.0
  %1405 = vmatpush2.msra.mxu0 0.0
  %1406 = vmatprep.subr.mxu0 0.0
  %1407 = vmatpush2.msra.mxu0 0.0
  %1408 = vmatprep.subr.mxu0 0.0
  %1409 = vmatpush2.msra.mxu0 0.0
  %1410 = vmatprep.subr.mxu0 0.0
  %1411 = vmatpush2.msra.mxu0 0.0
  %1412 = vmatprep.mubr.f32.mxu0 0.0
  %1413 = vmatmul.mubr.f32.gmra.mxu0 %v1263
  %v1414 = vpop.f32.mrf.mxu0
  %v1415 = vadd.f32 0.0, %v1414
  %v1416 = vpop.f32.mrf.mxu0
  %v1417 = vadd.f32 0.0, %v1416
  %1418 = vdwg.mxu0
  %v1419 = vadd.f32 %v1243, %v1344
  %v1420 = vadd.f32 %v1244, %v1346
  %v1421 = vadd.f32 %v1245, %v1415
  %v1422 = vadd.f32 %v1246, %v1417
  %1423 = vrot.lane.b32.xlu0 %v14, 94
  %v1424 = vpop.permute.xlu0 %1423
  %1425 = vrot.lane.b32.xlu0 %v18, 94
  %v1426 = vpop.permute.xlu0 %1425
  %1427 = vrot.lane.b32.xlu0 %v16, 94
  %v1428 = vpop.permute.xlu0 %1427
  %1429 = vrot.lane.b32.xlu0 %v21, 94
  %v1430 = vpop.permute.xlu0 %1429
  %vm1431 = vcmp.lt.s32.totalorder %v198, 94
  %v1432 = vsel %vm1431, %v1428, %v1430
  %v1433 = vsel %vm1431, %v1426, %v1428
  %v1434 = vsel %vm1431, %v1424, %v1426
  %v1435 = vsel %vm1431, %v1430, %v1424
  %s1436 = scalar_lea.vmem %s1, 64
  %v1437 = vld [vmem:[%s1436] sm:$0xff]
  %v1439 = vsel %vm30, %v1437, 0
  %v1442 = vsel %vm34, %v1434, 0
  %v1445 = vsel %vm34, %v1433, 0
  %v1448 = vsel %vm34, %v1432, 0
  %v1451 = vsel %vm34, %v1435, 0
  %1453 = vmatprep.subr.mxu0 0.0
  %1454 = vmatpush1.msra.mxu0 0.0
  %1455 = vmatprep.subr.mxu0 0.0
  %1456 = vmatpush1.msra.mxu0 0.0
  %1457 = vmatprep.subr.mxu0 0.0
  %1458 = vmatpush1.msra.mxu0 0.0
  %1459 = vmatprep.subr.mxu0 0.0
  %1460 = vmatpush1.msra.mxu0 0.0
  %1461 = vmatprep.subr.mxu0 0.0
  %1462 = vmatpush1.msra.mxu0 0.0
  %1463 = vmatprep.subr.mxu0 0.0
  %1464 = vmatpush1.msra.mxu0 0.0
  %1465 = vmatprep.subr.mxu0 0.0
  %1466 = vmatpush1.msra.mxu0 0.0
  %1467 = vmatprep.subr.mxu0 0.0
  %1468 = vmatpush1.msra.mxu0 0.0
  %1469 = vmatprep.subr.mxu0 0.0
  %1470 = vmatpush1.msra.mxu0 0.0
  %1471 = vmatprep.subr.mxu0 0.0
  %1472 = vmatpush1.msra.mxu0 0.0
  %1473 = vmatprep.subr.mxu0 0.0
  %1474 = vmatpush1.msra.mxu0 0.0
  %1475 = vmatprep.subr.mxu0 0.0
  %1476 = vmatpush1.msra.mxu0 0.0
  %1477 = vmatprep.subr.mxu0 0.0
  %1478 = vmatpush1.msra.mxu0 0.0
  %1479 = vmatprep.subr.mxu0 0.0
  %1480 = vmatpush1.msra.mxu0 0.0
  %1481 = vmatprep.subr.mxu0 0.0
  %1482 = vmatpush1.msra.mxu0 0.0
  %1483 = vmatprep.subr.mxu0 %v1445
  %1484 = vmatpush1.msra.mxu0 %v1442
  %1485 = vmatprep.subr.mxu0 0.0
  %1486 = vmatpush2.msra.mxu0 0.0
  %1487 = vmatprep.subr.mxu0 0.0
  %1488 = vmatpush2.msra.mxu0 0.0
  %1489 = vmatprep.subr.mxu0 0.0
  %1490 = vmatpush2.msra.mxu0 0.0
  %1491 = vmatprep.subr.mxu0 0.0
  %1492 = vmatpush2.msra.mxu0 0.0
  %1493 = vmatprep.subr.mxu0 0.0
  %1494 = vmatpush2.msra.mxu0 0.0
  %1495 = vmatprep.subr.mxu0 0.0
  %1496 = vmatpush2.msra.mxu0 0.0
  %1497 = vmatprep.subr.mxu0 0.0
  %1498 = vmatpush2.msra.mxu0 0.0
  %1499 = vmatprep.subr.mxu0 0.0
  %1500 = vmatpush2.msra.mxu0 0.0
  %1501 = vmatprep.subr.mxu0 0.0
  %1502 = vmatpush2.msra.mxu0 0.0
  %1503 = vmatprep.subr.mxu0 0.0
  %1504 = vmatpush2.msra.mxu0 0.0
  %1505 = vmatprep.subr.mxu0 0.0
  %1506 = vmatpush2.msra.mxu0 0.0
  %1507 = vmatprep.subr.mxu0 0.0
  %1508 = vmatpush2.msra.mxu0 0.0
  %1509 = vmatprep.subr.mxu0 0.0
  %1510 = vmatpush2.msra.mxu0 0.0
  %1511 = vmatprep.subr.mxu0 0.0
  %1512 = vmatpush2.msra.mxu0 0.0
  %1513 = vmatprep.subr.mxu0 0.0
  %1514 = vmatpush2.msra.mxu0 0.0
  %1515 = vmatprep.subr.mxu0 0.0
  %1516 = vmatpush2.msra.mxu0 0.0
  %1517 = vmatprep.mubr.f32.mxu0 0.0
  %1518 = vmatmul.mubr.f32.gmra.mxu0 %v1439
  %v1519 = vpop.f32.mrf.mxu0
  %v1520 = vadd.f32 0.0, %v1519
  %v1521 = vpop.f32.mrf.mxu0
  %v1522 = vadd.f32 0.0, %v1521
  %1523 = vdwg.mxu0
  %1524 = vmatprep.subr.mxu0 0.0
  %1525 = vmatpush1.msra.mxu0 0.0
  %1526 = vmatprep.subr.mxu0 0.0
  %1527 = vmatpush1.msra.mxu0 0.0
  %1528 = vmatprep.subr.mxu0 0.0
  %1529 = vmatpush1.msra.mxu0 0.0
  %1530 = vmatprep.subr.mxu0 0.0
  %1531 = vmatpush1.msra.mxu0 0.0
  %1532 = vmatprep.subr.mxu0 0.0
  %1533 = vmatpush1.msra.mxu0 0.0
  %1534 = vmatprep.subr.mxu0 0.0
  %1535 = vmatpush1.msra.mxu0 0.0
  %1536 = vmatprep.subr.mxu0 0.0
  %1537 = vmatpush1.msra.mxu0 0.0
  %1538 = vmatprep.subr.mxu0 0.0
  %1539 = vmatpush1.msra.mxu0 0.0
  %1540 = vmatprep.subr.mxu0 0.0
  %1541 = vmatpush1.msra.mxu0 0.0
  %1542 = vmatprep.subr.mxu0 0.0
  %1543 = vmatpush1.msra.mxu0 0.0
  %1544 = vmatprep.subr.mxu0 0.0
  %1545 = vmatpush1.msra.mxu0 0.0
  %1546 = vmatprep.subr.mxu0 0.0
  %1547 = vmatpush1.msra.mxu0 0.0
  %1548 = vmatprep.subr.mxu0 0.0
  %1549 = vmatpush1.msra.mxu0 0.0
  %1550 = vmatprep.subr.mxu0 0.0
  %1551 = vmatpush1.msra.mxu0 0.0
  %1552 = vmatprep.subr.mxu0 0.0
  %1553 = vmatpush1.msra.mxu0 0.0
  %1554 = vmatprep.subr.mxu0 %v1451
  %1555 = vmatpush1.msra.mxu0 %v1448
  %1556 = vmatprep.subr.mxu0 0.0
  %1557 = vmatpush2.msra.mxu0 0.0
  %1558 = vmatprep.subr.mxu0 0.0
  %1559 = vmatpush2.msra.mxu0 0.0
  %1560 = vmatprep.subr.mxu0 0.0
  %1561 = vmatpush2.msra.mxu0 0.0
  %1562 = vmatprep.subr.mxu0 0.0
  %1563 = vmatpush2.msra.mxu0 0.0
  %1564 = vmatprep.subr.mxu0 0.0
  %1565 = vmatpush2.msra.mxu0 0.0
  %1566 = vmatprep.subr.mxu0 0.0
  %1567 = vmatpush2.msra.mxu0 0.0
  %1568 = vmatprep.subr.mxu0 0.0
  %1569 = vmatpush2.msra.mxu0 0.0
  %1570 = vmatprep.subr.mxu0 0.0
  %1571 = vmatpush2.msra.mxu0 0.0
  %1572 = vmatprep.subr.mxu0 0.0
  %1573 = vmatpush2.msra.mxu0 0.0
  %1574 = vmatprep.subr.mxu0 0.0
  %1575 = vmatpush2.msra.mxu0 0.0
  %1576 = vmatprep.subr.mxu0 0.0
  %1577 = vmatpush2.msra.mxu0 0.0
  %1578 = vmatprep.subr.mxu0 0.0
  %1579 = vmatpush2.msra.mxu0 0.0
  %1580 = vmatprep.subr.mxu0 0.0
  %1581 = vmatpush2.msra.mxu0 0.0
  %1582 = vmatprep.subr.mxu0 0.0
  %1583 = vmatpush2.msra.mxu0 0.0
  %1584 = vmatprep.subr.mxu0 0.0
  %1585 = vmatpush2.msra.mxu0 0.0
  %1586 = vmatprep.subr.mxu0 0.0
  %1587 = vmatpush2.msra.mxu0 0.0
  %1588 = vmatprep.mubr.f32.mxu0 0.0
  %1589 = vmatmul.mubr.f32.gmra.mxu0 %v1439
  %v1590 = vpop.f32.mrf.mxu0
  %v1591 = vadd.f32 0.0, %v1590
  %v1592 = vpop.f32.mrf.mxu0
  %v1593 = vadd.f32 0.0, %v1592
  %1594 = vdwg.mxu0
  %v1595 = vadd.f32 %v1419, %v1520
  %v1596 = vadd.f32 %v1420, %v1522
  %v1597 = vadd.f32 %v1421, %v1591
  %v1598 = vadd.f32 %v1422, %v1593
  %1599 = vst [vmem:[%s3] sm:$0xff] %v1595
  %1600 = vst [vmem:[%s3 + $0x8] sm:$0xff] %v1596
  %s1601 = scalar_lea.vmem %s3, 16
  %1602 = vst [vmem:[%s1601] sm:$0xff] %v1597
  %1603 = vst [vmem:[%s1601 + $0x8] sm:$0xff] %v1598
  // Predicated region
  $region14: #{conv2d_pallas.1} parent=0 // pred_check
    _
  $region15: #{conv2d_pallas.1} parent=0 // pred_check_branch
    %1605 = sbr.rel (0) target = $region17
  $region16: #{conv2d_pallas.1} parent=0 // pred_region
    _
  $region17: #{conv2d_pallas.1} parent=0 // pred_fallthru
    _
  // Predicated region
  $region18: #{conv2d_pallas.1} parent=0 // pred_check
    _
  $region19: #{conv2d_pallas.1} parent=0 // pred_check_branch
    %1607 = sbr.rel (0) target = $region21
  $region20: #{conv2d_pallas.1} parent=0 // pred_region
    _
  $region21: #{conv2d_pallas.1} parent=0 // pred_fallthru
    _

</llo_original>
